<compile_context>
chip_gen: v7x
topology: tpu7x:2x2x1
jax: 0.10.0
libtpu: 0.0.40
codegen_flags: <defaults>
</compile_context>

<pallas_src>
import jax
import jax.numpy as jnp
from jax.experimental import pallas as pl
from jax.experimental.pallas import tpu as pltpu

KSIZE = 5
PAD = 2


# ----------------------------------------------------------------------------
# Fused kernel: conv-as-GEMM + bias + ReLU + linear classifier (one image/step)
# ----------------------------------------------------------------------------
def fused_conv_relu_fc_kernel(p_ref, cw_ref, cb_ref, fw_ref, fb_ref, o_ref):
    # p_ref : (1, K, HW)        transposed im2col patches for this image
    # cw_ref: (Cout, K)         conv weights, K in (dy, dx, ci) order
    # cb_ref: (Cout, 1)         conv bias (broadcasts over lanes)
    # fw_ref: (C, Cout, HW)     fc weights, classes leading, lane dim = HW
    # fb_ref: (C, 1)            fc bias
    # o_ref : (1, C, 1)         logits for this image
    patches = p_ref[0]                                              # (K, HW)
    act = jnp.dot(cw_ref[...], patches,
                  preferred_element_type=jnp.float32)               # MXU: (Cout, HW)
    act = jnp.maximum(act + cb_ref[...], 0.0)                       # bias + ReLU (VPU)

    # Classifier: logits[c] = sum_{co, r} act[co, r] * fw[c, co, r]
    # (VPU multiply + reductions; activation stays in its natural layout.)
    contrib = jnp.sum(fw_ref[...] * act[None, :, :], axis=-1)       # (C, Cout)
    logits = jnp.sum(contrib, axis=-1, keepdims=True) + fb_ref[...] # (C, 1)
    o_ref[0] = logits.astype(o_ref.dtype)


# ----------------------------------------------------------------------------
# One-time weight-side layout preparation (hoisted out of the hot path)
# ----------------------------------------------------------------------------
def prepare_params(conv_w, conv_b, fc_w, fc_b):
    ks, _, cin, cout = conv_w.shape
    k_raw = ks * ks * cin
    num_classes = fc_w.shape[-1]
    hw = fc_w.shape[0] // cout
    cwT = jnp.transpose(conv_w.reshape(k_raw, cout))                        # (Cout, K)
    cb_col = conv_b.reshape(cout, 1)                                        # (Cout, 1)
    # fc_w rows follow PyTorch's NCHW .view() order: k = co * HW + r.
    fwK = jnp.transpose(fc_w.reshape(cout, hw, num_classes), (2, 0, 1))     # (C, Cout, HW)
    fb_col = fc_b.reshape(num_classes, 1)                                   # (C, 1)
    return cwT, cb_col, fwK, fb_col


# ----------------------------------------------------------------------------
# Wrapper reproducing ExampleModel.forward (hot path; jit this)
# ----------------------------------------------------------------------------
def example_model_forward(x_nchw, cwT, cb_col, fwK, fb_col):
    B, Cin, H, W = x_nchw.shape
    Cout, K = cwT.shape
    num_classes, _, HW = fwK.shape
    assert HW == H * W

    # im2col glue (pure XLA data movement): (B, K, HW) with HW as the lane dim.
    xp = jnp.pad(x_nchw, ((0, 0), (0, 0), (PAD, PAD), (PAD, PAD)))
    taps = []
    for dy in range(KSIZE):
        for dx in range(KSIZE):
            taps.append(xp[:, :, dy:dy + H, dx:dx + W].reshape(B, Cin, HW))
    patches = jnp.concatenate(taps, axis=1)                         # (B, K, HW)

    out = pl.pallas_call(
        fused_conv_relu_fc_kernel,
        out_shape=jax.ShapeDtypeStruct((B, num_classes, 1), x_nchw.dtype),
        grid_spec=pltpu.PrefetchScalarGridSpec(
            num_scalar_prefetch=0,
            grid=(B,),
            in_specs=[
                pl.BlockSpec((1, K, HW), lambda b: (b, 0, 0)),
                pl.BlockSpec((Cout, K), lambda b: (0, 0)),
                pl.BlockSpec((Cout, 1), lambda b: (0, 0)),
                pl.BlockSpec((num_classes, Cout, HW), lambda b: (0, 0, 0)),
                pl.BlockSpec((num_classes, 1), lambda b: (0, 0)),
            ],
            out_specs=pl.BlockSpec((1, num_classes, 1), lambda b: (b, 0, 0)),
        ),
        compiler_params=pltpu.CompilerParams(
            dimension_semantics=("parallel",)),
    )(patches, cwT, cb_col, fwK, fb_col)

    return out.reshape(B, num_classes)


# ----------------------------------------------------------------------------
# Pure-JAX reference for validation
# ----------------------------------------------------------------------------
def reference_forward(x_nchw, conv_w, conv_b, fc_w, fc_b):
    w_oihw = jnp.transpose(conv_w, (3, 2, 0, 1))
    y = jax.lax.conv_general_dilated(
        x_nchw, w_oihw, window_strides=(1, 1),
        padding=((PAD, PAD), (PAD, PAD)),
        dimension_numbers=("NCHW", "OIHW", "NCHW"))
    y = jnp.maximum(y + conv_b[None, :, None, None], 0.0)
    flat = y.reshape(x_nchw.shape[0], -1)
    return flat @ fc_w + fc_b


if __name__ == "__main__":
    # ExampleModel(image_channels=3, num_classes=10) on 32x32 images
    # (spatial size fixed by self.num_output_features = 32*32*32).
    batch = 2
    image_channels = 3
    num_classes = 10
    H = W = 32
    num_filters = 32

    key = jax.random.PRNGKey(0)
    k1, k2, k3, k4, k5 = jax.random.split(key, 5)
    conv_w = 0.05 * jax.random.normal(
        k1, (KSIZE, KSIZE, image_channels, num_filters), jnp.float32)
    conv_b = 0.05 * jax.random.normal(k2, (num_filters,), jnp.float32)
    fc_w = 0.01 * jax.random.normal(
        k3, (num_filters * H * W, num_classes), jnp.float32)
    fc_b = 0.01 * jax.random.normal(k4, (num_classes,), jnp.float32)
    x = jax.random.normal(k5, (batch, image_channels, H, W), jnp.float32)

    # One-time weight-layout prep (not part of the per-step hot path).
    params = prepare_params(conv_w, conv_b, fc_w, fc_b)
    params = tuple(jax.block_until_ready(p) for p in params)

    fwd = jax.jit(example_model_forward)
    out = jax.block_until_ready(fwd(x, *params))

    assert out.shape == (batch, num_classes), out.shape
    assert bool(jnp.all(jnp.isfinite(out)))

    ref = reference_forward(x, conv_w, conv_b, fc_w, fc_b)
    assert jnp.allclose(out, ref, atol=1e-3, rtol=1e-3), \
        f"max abs diff {jnp.max(jnp.abs(out - ref))}"

    print("KERNEL_OK")
</pallas_src>

<mosaic_0001>
module attributes {stable_mosaic.version = 11 : i64} {
  func.func @fused_conv_relu_fc_kernel(%arg0: i32, %arg1: memref<1x75x1024xf32, #tpu.memory_space<vmem>>, %arg2: memref<32x75xf32, #tpu.memory_space<vmem>>, %arg3: memref<32x1xf32, #tpu.memory_space<vmem>>, %arg4: memref<10x32x1024xf32, #tpu.memory_space<vmem>>, %arg5: memref<10x1xf32, #tpu.memory_space<vmem>>, %arg6: memref<1x10x1xf32, #tpu.memory_space<vmem>>) attributes {dimension_semantics = [#tpu.dimension_semantics<parallel>], iteration_bounds = array<i64: 2>, scalar_prefetch = 0 : i64, scratch_operands = 0 : i64, tpu.core_type = #tpu.core_type<tc>, window_params = [{transform_indices = @transform_0, window_bounds = array<i64: 1, 75, 1024>}, {pipeline_mode = #tpu.pipeline_mode<synchronous>, transform_indices = @transform_1, window_bounds = array<i64: 32, 75>}, {pipeline_mode = #tpu.pipeline_mode<synchronous>, transform_indices = @transform_2, window_bounds = array<i64: 32, 1>}, {pipeline_mode = #tpu.pipeline_mode<synchronous>, transform_indices = @transform_3, window_bounds = array<i64: 10, 32, 1024>}, {pipeline_mode = #tpu.pipeline_mode<synchronous>, transform_indices = @transform_4, window_bounds = array<i64: 10, 1>}, {transform_indices = @transform_5, window_bounds = array<i64: 1, 10, 1>}]} {
    %c0 = arith.constant 0 : index
    %c0_0 = arith.constant 0 : index
    %c0_1 = arith.constant 0 : index
    %0 = vector.load %arg1[%c0, %c0_0, %c0_1] : memref<1x75x1024xf32, #tpu.memory_space<vmem>>, vector<1x75x1024xf32>
    %1 = vector.shape_cast %0 : vector<1x75x1024xf32> to vector<75x1024xf32>
    %c0_2 = arith.constant 0 : index
    %c0_3 = arith.constant 0 : index
    %2 = vector.load %arg2[%c0_2, %c0_3] : memref<32x75xf32, #tpu.memory_space<vmem>>, vector<32x75xf32>
    %cst = arith.constant dense<0.000000e+00> : vector<32x1024xf32>
    %3 = tpu.matmul %2, %1, %cst {dimension_numbers = #tpu.dot_dimension_numbers<[1], [0], [0], [1], [0, 0, 1, 1], [], []>} : vector<32x75xf32>, vector<75x1024xf32>, vector<32x1024xf32> -> vector<32x1024xf32>
    %c0_4 = arith.constant 0 : index
    %c0_5 = arith.constant 0 : index
    %4 = vector.load %arg3[%c0_4, %c0_5] : memref<32x1xf32, #tpu.memory_space<vmem>>, vector<32x1xf32>
    %5 = vector.broadcast %4 : vector<32x1xf32> to vector<32x1024xf32>
    %6 = arith.addf %3, %5 : vector<32x1024xf32>
    %cst_6 = arith.constant 0.000000e+00 : f32
    %7 = vector.broadcast %cst_6 : f32 to vector<32x1024xf32>
    %8 = arith.maximumf %6, %7 : vector<32x1024xf32>
    %c0_7 = arith.constant 0 : index
    %c0_8 = arith.constant 0 : index
    %c0_9 = arith.constant 0 : index
    %9 = vector.load %arg4[%c0_7, %c0_8, %c0_9] : memref<10x32x1024xf32, #tpu.memory_space<vmem>>, vector<10x32x1024xf32>
    %10 = vector.shape_cast %8 : vector<32x1024xf32> to vector<1x32x1024xf32>
    %11 = vector.broadcast %10 : vector<1x32x1024xf32> to vector<10x32x1024xf32>
    %12 = arith.mulf %9, %11 : vector<10x32x1024xf32>
    %cst_10 = arith.constant dense<0.000000e+00> : vector<10x32xf32>
    %13 = vector.multi_reduction <add>, %12, %cst_10 [2] : vector<10x32x1024xf32> to vector<10x32xf32>
    %cst_11 = arith.constant dense<0.000000e+00> : vector<10xf32>
    %14 = vector.multi_reduction <add>, %13, %cst_11 [1] : vector<10x32xf32> to vector<10xf32>
    %15 = vector.shape_cast %14 : vector<10xf32> to vector<10x1xf32>
    %c0_12 = arith.constant 0 : index
    %c0_13 = arith.constant 0 : index
    %16 = vector.load %arg5[%c0_12, %c0_13] : memref<10x1xf32, #tpu.memory_space<vmem>>, vector<10x1xf32>
    %17 = arith.addf %15, %16 : vector<10x1xf32>
    %c0_14 = arith.constant 0 : index
    %c0_15 = arith.constant 0 : index
    %c0_16 = arith.constant 0 : index
    %18 = vector.load %arg6[%c0_14, %c0_15, %c0_16] : memref<1x10x1xf32, #tpu.memory_space<vmem>>, vector<1x10x1xf32>
    %19 = vector.shape_cast %18 : vector<1x10x1xf32> to vector<10x1xf32>
    %20 = vector.shape_cast %17 : vector<10x1xf32> to vector<1x10x1xf32>
    tpu.vector_store %arg6[%c0_14, %c0_15, %c0_16], %20 {strides = array<i32>} : memref<1x10x1xf32, #tpu.memory_space<vmem>>, vector<1x10x1xf32>,
    return
  }
  func.func @transform_0(%arg0: i32) -> (i32, i32, i32) {
    %c0_i32 = arith.constant 0 : i32
    %c0_i32_0 = arith.constant 0 : i32
    %c0_i32_1 = arith.constant 0 : i32
    return %arg0, %c0_i32, %c0_i32_0 : i32, i32, i32
  }
  func.func @transform_1(%arg0: i32) -> (i32, i32) {
    %c0_i32 = arith.constant 0 : i32
    %c0_i32_0 = arith.constant 0 : i32
    %c0_i32_1 = arith.constant 0 : i32
    return %c0_i32, %c0_i32_0 : i32, i32
  }
  func.func @transform_2(%arg0: i32) -> (i32, i32) {
    %c0_i32 = arith.constant 0 : i32
    %c0_i32_0 = arith.constant 0 : i32
    %c0_i32_1 = arith.constant 0 : i32
    return %c0_i32, %c0_i32_0 : i32, i32
  }
  func.func @transform_3(%arg0: i32) -> (i32, i32, i32) {
    %c0_i32 = arith.constant 0 : i32
    %c0_i32_0 = arith.constant 0 : i32
    %c0_i32_1 = arith.constant 0 : i32
    %c0_i32_2 = arith.constant 0 : i32
    return %c0_i32, %c0_i32_0, %c0_i32_1 : i32, i32, i32
  }
  func.func @transform_4(%arg0: i32) -> (i32, i32) {
    %c0_i32 = arith.constant 0 : i32
    %c0_i32_0 = arith.constant 0 : i32
    %c0_i32_1 = arith.constant 0 : i32
    return %c0_i32, %c0_i32_0 : i32, i32
  }
  func.func @transform_5(%arg0: i32) -> (i32, i32, i32) {
    %c0_i32 = arith.constant 0 : i32
    %c0_i32_0 = arith.constant 0 : i32
    %c0_i32_1 = arith.constant 0 : i32
    return %arg0, %c0_i32, %c0_i32_0 : i32, i32, i32
  }
}

</mosaic_0001>

<llo_original>
// kernel: example_model_forward.1
$region0: #{example_model_forward.1}
  #allocation0 [shape = 'u32[]', space=smem, size = 0x4, offset = 0x4, fixed_abs, tag = 'smem constant byte address 0x4 - core index']
  #allocation1 [shape = 'u32[144,128]{1,0:T(1,128)}', space=vmem, size = 0x12000, scoped, tag = 'internal scratch']
  %s0 = inlined_call_operand.vmem [shape: f32[2,75,1024], index: 0, kind: input, shape index: {}]
  %s1 = inlined_call_operand.vmem [shape: f32[32,75], index: 1, kind: input, shape index: {}]
  %s2 = inlined_call_operand.vmem [shape: f32[32,1], index: 2, kind: input, shape index: {}]
  %s3 = inlined_call_operand.vmem [shape: f32[10,32,1024], index: 3, kind: input, shape index: {}]
  %s4 = inlined_call_operand.vmem [shape: f32[10,1], index: 4, kind: input, shape index: {}]
  %s5 = inlined_call_operand.vmem [shape: f32[2,10,1], index: 5, kind: output, shape index: {}]
  %s6 = sld [smem:[#allocation0]]
  $region53: #{example_model_forward.1} parent=0
    _
  %s8 = ssub.s32 1, %s6
  %s9 = scalar_select 0, %s8, %s6
  loop: start=0, step=1, limit=4
  $region2: #{example_model_forward.1} parent=0 // loop_pre_header
    _
  $region3: #{example_model_forward.1} parent=0 // loop_header
    %s11 = sphi 0, %s15
    %p12 = scmp.ge.s32.totalorder %s11, 4
    %s21 = sphi 0, %s23
    %s24 = sphi 0, %s21
    %s25 = sphi 0, %s24
    %s41 = sphi 0, %s25
    %s45 = sphi 0, %s45
    %s47 = sphi 0, %s45
    %s48 = sphi 0, %s47
    %s62 = sphi 0, %s48
    %s66 = sphi 0, %s66
    %s68 = sphi 0, %s66
    %s69 = sphi 0, %s68
    %s83 = sphi 0, %s69
    %s87 = sphi 0, %s87
    %s89 = sphi 0, %s87
    %s90 = sphi 0, %s89
    %s104 = sphi 0, %s90
    %s108 = sphi 0, %s108
    %s110 = sphi 0, %s108
    %s111 = sphi 0, %s110
    %s125 = sphi 0, %s111
    %s131 = sphi 0, %s133
    %s134 = sphi 0, %s131
    %s135 = sphi 0, %s134
    %s151 = sphi 0, %s135
  $region4: #{example_model_forward.1} parent=0 // loop_header_branch
    %14 = sbr.rel (%p12) target = $region8
  $region5: #{example_model_forward.1} parent=0 // loop_body
    %s16 = ssub.s32 %s11, 1
    %s17 = ssub.s32 %s11, 2
    %s18 = sadd.s32 %s11, 1
    %s19 = ssub.s32 %s11, %s18
    %p20 = scmp.eq.s32.totalorder %s19, 0
    %s22 = sadd.s32 %s21, 1
    %s23 = scalar_select %p20, %s21, %s22
    %p26 = pneg %p20
    %p27 = scmp.eq.s32.totalorder %s11, 1
    %p28 = por %p26, %p27
    %p29 = scmp.ne.s32.totalorder %s21, %s24
    %p30 = scmp.eq.s32.totalorder %s11, 0
    %p31 = por %p29, %p30
    %p32 = scmp.ne.s32.totalorder %s21, %s24
    %p33 = scmp.eq.s32.totalorder %s16, 1
    %p34 = por %p32, %p33
    %p35 = scmp.ne.s32.totalorder %s24, %s25
    %p36 = scmp.eq.s32.totalorder %s16, 0
    %p37 = por %p35, %p36
    %p38 = scmp.ne.s32.totalorder %s24, %s25
    %p39 = scmp.eq.s32.totalorder %s17, 1
    %p40 = por %p38, %p39
    %p42 = scmp.ne.s32.totalorder %s25, %s41
    %p43 = scmp.eq.s32.totalorder %s17, 0
    %p44 = por %p42, %p43
    %s46 = sadd.s32 %s45, 1
    %p49 = scmp.eq.s32.totalorder %s11, 1
    %p50 = scmp.ne.s32.totalorder %s45, %s47
    %p51 = scmp.eq.s32.totalorder %s11, 0
    %p52 = por %p50, %p51
    %p53 = scmp.ne.s32.totalorder %s45, %s47
    %p54 = scmp.eq.s32.totalorder %s16, 1
    %p55 = por %p53, %p54
    %p56 = scmp.ne.s32.totalorder %s47, %s48
    %p57 = scmp.eq.s32.totalorder %s16, 0
    %p58 = por %p56, %p57
    %p59 = scmp.ne.s32.totalorder %s47, %s48
    %p60 = scmp.eq.s32.totalorder %s17, 1
    %p61 = por %p59, %p60
    %p63 = scmp.ne.s32.totalorder %s48, %s62
    %p64 = scmp.eq.s32.totalorder %s17, 0
    %p65 = por %p63, %p64
    %s67 = sadd.s32 %s66, 1
    %p70 = scmp.eq.s32.totalorder %s11, 1
    %p71 = scmp.ne.s32.totalorder %s66, %s68
    %p72 = scmp.eq.s32.totalorder %s11, 0
    %p73 = por %p71, %p72
    %p74 = scmp.ne.s32.totalorder %s66, %s68
    %p75 = scmp.eq.s32.totalorder %s16, 1
    %p76 = por %p74, %p75
    %p77 = scmp.ne.s32.totalorder %s68, %s69
    %p78 = scmp.eq.s32.totalorder %s16, 0
    %p79 = por %p77, %p78
    %p80 = scmp.ne.s32.totalorder %s68, %s69
    %p81 = scmp.eq.s32.totalorder %s17, 1
    %p82 = por %p80, %p81
    %p84 = scmp.ne.s32.totalorder %s69, %s83
    %p85 = scmp.eq.s32.totalorder %s17, 0
    %p86 = por %p84, %p85
    %s88 = sadd.s32 %s87, 1
    %p91 = scmp.eq.s32.totalorder %s11, 1
    %p92 = scmp.ne.s32.totalorder %s87, %s89
    %p93 = scmp.eq.s32.totalorder %s11, 0
    %p94 = por %p92, %p93
    %p95 = scmp.ne.s32.totalorder %s87, %s89
    %p96 = scmp.eq.s32.totalorder %s16, 1
    %p97 = por %p95, %p96
    %p98 = scmp.ne.s32.totalorder %s89, %s90
    %p99 = scmp.eq.s32.totalorder %s16, 0
    %p100 = por %p98, %p99
    %p101 = scmp.ne.s32.totalorder %s89, %s90
    %p102 = scmp.eq.s32.totalorder %s17, 1
    %p103 = por %p101, %p102
    %p105 = scmp.ne.s32.totalorder %s90, %s104
    %p106 = scmp.eq.s32.totalorder %s17, 0
    %p107 = por %p105, %p106
    %s109 = sadd.s32 %s108, 1
    %p112 = scmp.eq.s32.totalorder %s11, 1
    %p113 = scmp.ne.s32.totalorder %s108, %s110
    %p114 = scmp.eq.s32.totalorder %s11, 0
    %p115 = por %p113, %p114
    %p116 = scmp.ne.s32.totalorder %s108, %s110
    %p117 = scmp.eq.s32.totalorder %s16, 1
    %p118 = por %p116, %p117
    %p119 = scmp.ne.s32.totalorder %s110, %s111
    %p120 = scmp.eq.s32.totalorder %s16, 0
    %p121 = por %p119, %p120
    %p122 = scmp.ne.s32.totalorder %s110, %s111
    %p123 = scmp.eq.s32.totalorder %s17, 1
    %p124 = por %p122, %p123
    %p126 = scmp.ne.s32.totalorder %s111, %s125
    %p127 = scmp.eq.s32.totalorder %s17, 0
    %p128 = por %p126, %p127
    %s129 = ssub.s32 %s11, %s18
    %p130 = scmp.eq.s32.totalorder %s129, 0
    %s132 = sadd.s32 %s131, 1
    %s133 = scalar_select %p130, %s131, %s132
    %p136 = pneg %p130
    %p137 = scmp.eq.s32.totalorder %s11, 1
    %p138 = por %p136, %p137
    %p139 = scmp.ne.s32.totalorder %s131, %s134
    %p140 = scmp.eq.s32.totalorder %s11, 0
    %p141 = por %p139, %p140
    %p142 = scmp.ne.s32.totalorder %s131, %s134
    %p143 = scmp.eq.s32.totalorder %s16, 1
    %p144 = por %p142, %p143
    %p145 = scmp.ne.s32.totalorder %s134, %s135
    %p146 = scmp.eq.s32.totalorder %s16, 0
    %p147 = por %p145, %p146
    %p148 = scmp.ne.s32.totalorder %s134, %s135
    %p149 = scmp.eq.s32.totalorder %s17, 1
    %p150 = por %p148, %p149
    %p152 = scmp.ne.s32.totalorder %s135, %s151
    %p153 = scmp.eq.s32.totalorder %s17, 0
    %p154 = por %p152, %p153
    %p155 = scmp.le.s32.totalorder 1, %s11
    %p156 = scmp.lt.s32.totalorder %s11, 3
    %p157 = pnand %p155, %p156
    %p158 = pneg %p157
    // Predicated region
    $region9: #{example_model_forward.1} parent=5 // pred_check
      _
    $region10: #{example_model_forward.1} parent=5 // pred_check_branch
      %160 = sbr.rel (%p157) target = $region12
    $region11: #{example_model_forward.1} parent=5 // pred_region
      %s161 = ssub.s32 %s11, 1
      // Predicated region
      $region13: #{example_model_forward.1} parent=11 // pred_check
        %p162 = pneg %p58
      $region14: #{example_model_forward.1} parent=11 // pred_check_branch
        %164 = sbr.rel (%p162) target = $region16
      $region15: #{example_model_forward.1} parent=11 // pred_region
        _
      $region16: #{example_model_forward.1} parent=11 // pred_fallthru
        _
      // Predicated region
      $region17: #{example_model_forward.1} parent=11 // pred_check
        %p165 = pneg %p79
      $region18: #{example_model_forward.1} parent=11 // pred_check_branch
        %167 = sbr.rel (%p165) target = $region20
      $region19: #{example_model_forward.1} parent=11 // pred_region
        _
      $region20: #{example_model_forward.1} parent=11 // pred_fallthru
        _
      // Predicated region
      $region21: #{example_model_forward.1} parent=11 // pred_check
        %p168 = pneg %p100
      $region22: #{example_model_forward.1} parent=11 // pred_check_branch
        %170 = sbr.rel (%p168) target = $region24
      $region23: #{example_model_forward.1} parent=11 // pred_region
        _
      $region24: #{example_model_forward.1} parent=11 // pred_fallthru
        _
      // Predicated region
      $region25: #{example_model_forward.1} parent=11 // pred_check
        %p171 = pneg %p121
      $region26: #{example_model_forward.1} parent=11 // pred_check_branch
        %173 = sbr.rel (%p171) target = $region28
      $region27: #{example_model_forward.1} parent=11 // pred_region
        _
      $region28: #{example_model_forward.1} parent=11 // pred_fallthru
        _
    $region12: #{example_model_forward.1} parent=5 // pred_fallthru
      _
    %p174 = scmp.lt.s32.totalorder %s11, 2
    // Predicated region
    $region29: #{example_model_forward.1} parent=5 // pred_check
      %p175 = pneg %p174
    $region30: #{example_model_forward.1} parent=5 // pred_check_branch
      %177 = sbr.rel (%p175) target = $region32
    $region31: #{example_model_forward.1} parent=5 // pred_region
      // Predicated region
      $region33: #{example_model_forward.1} parent=31 // pred_check
        %p178 = pneg %p31
      $region34: #{example_model_forward.1} parent=31 // pred_check_branch
        %180 = sbr.rel (%p178) target = $region36
      $region35: #{example_model_forward.1} parent=31 // pred_region
        %p181 = scmp.lt.s32.totalorder %s11, 1
        %s182 = scalar_select %p181, %s11, 1
        %s183 = smul.addr %s182, 80
        %s184 = smul.addr %s183, 8
        %s185 = scalar_lea.vmem %s0, %s184
      $region36: #{example_model_forward.1} parent=31 // pred_fallthru
        _
    $region32: #{example_model_forward.1} parent=5 // pred_fallthru
      _
    %p186 = scmp.le.s32.totalorder 1, %s11
    %p187 = scmp.lt.s32.totalorder %s11, 3
    %p188 = pnand %p186, %p187
    %p189 = pneg %p188
    // Predicated region
    $region37: #{example_model_forward.1} parent=5 // pred_check
      _
    $region38: #{example_model_forward.1} parent=5 // pred_check_branch
      %191 = sbr.rel (%p188) target = $region40
    $region39: #{example_model_forward.1} parent=5 // pred_region
      %s192 = ssub.s32 %s11, 1
      %p193 = scmp.lt.s32.totalorder %s16, 1
      %s194 = scalar_select %p193, %s16, 1
      %s195 = smul.addr %s194, 80
      %s196 = smul.addr %s195, 8
      %s197 = scalar_lea.vmem %s0, %s196
      %p198 = pneg %p37
      %p199 = pneg %p34
      %p200 = pneg %p58
      %p201 = pneg %p55
      %p202 = pneg %p79
      %p203 = pneg %p76
      %p204 = pneg %p100
      %p205 = pneg %p97
      %p206 = pneg %p121
      %p207 = pneg %p118
      %p208 = pneg %p147
      %p209 = pneg %p144
      %p210 = scmp.lt.s32.totalorder %s16, 1
      %s211 = scalar_select %p210, %s16, 1
      %s212 = smul.addr %s211, 2
      %s213 = smul.addr %s212, 8
      %s214 = scalar_lea.vmem %s5, %s213
      %p215 = scmp.lt.s32.totalorder %s16, 1
      %s216 = scalar_select %p215, %s16, 1
      %s217 = smul.addr %s216, 80
      %s218 = smul.addr %s217, 8
      %s219 = scalar_lea.vmem %s0, %s218
      %p220 = scmp.lt.s32.totalorder %s16, 1
      %s221 = scalar_select %p220, %s16, 1
      %s222 = smul.addr %s221, 2
      %s223 = smul.addr %s222, 8
      %s224 = scalar_lea.vmem %s5, %s223
      %v225 = vld [vmem:[%s219] sm:$0xff]
      %v226 = vld [vmem:[%s219 + $0x8] sm:$0xff]
      %v227 = vld [vmem:[%s219 + $0x10] sm:$0xff]
      %v228 = vld [vmem:[%s219 + $0x18] sm:$0xff]
      %v229 = vld [vmem:[%s219 + $0x20] sm:$0xff]
      %v230 = vld [vmem:[%s219 + $0x28] sm:$0xff]
      %v231 = vld [vmem:[%s219 + $0x30] sm:$0xff]
      %v232 = vld [vmem:[%s219 + $0x38] sm:$0xff]
      %v233 = vld [vmem:[%s219 + $0x40] sm:$0xff]
      %v234 = vld [vmem:[%s219 + $0x48] sm:$0xff]
      %v235 = vld [vmem:[%s219 + $0x50] sm:$0xff]
      %v236 = vld [vmem:[%s219 + $0x58] sm:$0xff]
      %v237 = vld [vmem:[%s219 + $0x60] sm:$0xff]
      %v238 = vld [vmem:[%s219 + $0x68] sm:$0xff]
      %v239 = vld [vmem:[%s219 + $0x70] sm:$0xff]
      %v240 = vld [vmem:[%s219 + $0x78] sm:$0xff]
      %v241 = vld [vmem:[%s219 + $0x80] sm:$0xff]
      %v242 = vld [vmem:[%s219 + $0x88] sm:$0xff]
      %v243 = vld [vmem:[%s219 + $0x90] sm:$0xff]
      %v244 = vld [vmem:[%s219 + $0x98] sm:$0xff]
      %v245 = vld [vmem:[%s219 + $0xa0] sm:$0xff]
      %v246 = vld [vmem:[%s219 + $0xa8] sm:$0xff]
      %v247 = vld [vmem:[%s219 + $0xb0] sm:$0xff]
      %v248 = vld [vmem:[%s219 + $0xb8] sm:$0xff]
      %v249 = vld [vmem:[%s219 + $0xc0] sm:$0xff]
      %v250 = vld [vmem:[%s219 + $0xc8] sm:$0xff]
      %v251 = vld [vmem:[%s219 + $0xd0] sm:$0xff]
      %v252 = vld [vmem:[%s219 + $0xd8] sm:$0xff]
      %v253 = vld [vmem:[%s219 + $0xe0] sm:$0xff]
      %v254 = vld [vmem:[%s219 + $0xe8] sm:$0xff]
      %v255 = vld [vmem:[%s219 + $0xf0] sm:$0xff]
      %v256 = vld [vmem:[%s219 + $0xf8] sm:$0xff]
      %v257 = vld [vmem:[%s219 + $0x100] sm:$0xff]
      %v258 = vld [vmem:[%s219 + $0x108] sm:$0xff]
      %v259 = vld [vmem:[%s219 + $0x110] sm:$0xff]
      %v260 = vld [vmem:[%s219 + $0x118] sm:$0xff]
      %v261 = vld [vmem:[%s219 + $0x120] sm:$0xff]
      %v262 = vld [vmem:[%s219 + $0x128] sm:$0xff]
      %v263 = vld [vmem:[%s219 + $0x130] sm:$0xff]
      %v264 = vld [vmem:[%s219 + $0x138] sm:$0xff]
      %v265 = vld [vmem:[%s219 + $0x140] sm:$0xff]
      %v266 = vld [vmem:[%s219 + $0x148] sm:$0xff]
      %v267 = vld [vmem:[%s219 + $0x150] sm:$0xff]
      %v268 = vld [vmem:[%s219 + $0x158] sm:$0xff]
      %v269 = vld [vmem:[%s219 + $0x160] sm:$0xff]
      %v270 = vld [vmem:[%s219 + $0x168] sm:$0xff]
      %v271 = vld [vmem:[%s219 + $0x170] sm:$0xff]
      %v272 = vld [vmem:[%s219 + $0x178] sm:$0xff]
      %v273 = vld [vmem:[%s219 + $0x180] sm:$0xff]
      %v274 = vld [vmem:[%s219 + $0x188] sm:$0xff]
      %v275 = vld [vmem:[%s219 + $0x190] sm:$0xff]
      %v276 = vld [vmem:[%s219 + $0x198] sm:$0xff]
      %v277 = vld [vmem:[%s219 + $0x1a0] sm:$0xff]
      %v278 = vld [vmem:[%s219 + $0x1a8] sm:$0xff]
      %v279 = vld [vmem:[%s219 + $0x1b0] sm:$0xff]
      %v280 = vld [vmem:[%s219 + $0x1b8] sm:$0xff]
      %v281 = vld [vmem:[%s219 + $0x1c0] sm:$0xff]
      %v282 = vld [vmem:[%s219 + $0x1c8] sm:$0xff]
      %v283 = vld [vmem:[%s219 + $0x1d0] sm:$0xff]
      %v284 = vld [vmem:[%s219 + $0x1d8] sm:$0xff]
      %v285 = vld [vmem:[%s219 + $0x1e0] sm:$0xff]
      %v286 = vld [vmem:[%s219 + $0x1e8] sm:$0xff]
      %v287 = vld [vmem:[%s219 + $0x1f0] sm:$0xff]
      %v288 = vld [vmem:[%s219 + $0x1f8] sm:$0xff]
      %v289 = vld [vmem:[%s219 + $0x200] sm:$0xff]
      %v290 = vld [vmem:[%s219 + $0x208] sm:$0xff]
      %v291 = vld [vmem:[%s219 + $0x210] sm:$0xff]
      %v292 = vld [vmem:[%s219 + $0x218] sm:$0xff]
      %v293 = vld [vmem:[%s219 + $0x220] sm:$0xff]
      %v294 = vld [vmem:[%s219 + $0x228] sm:$0xff]
      %v295 = vld [vmem:[%s219 + $0x230] sm:$0xff]
      %v296 = vld [vmem:[%s219 + $0x238] sm:$0xff]
      %v297 = vld [vmem:[%s219 + $0x240] sm:$0x7]
      %v298 = vld [vmem:[%s219 + $0x248] sm:$0x7]
      %v299 = vld [vmem:[%s219 + $0x250] sm:$0x7]
      %v300 = vld [vmem:[%s219 + $0x258] sm:$0x7]
      %v301 = vld [vmem:[%s219 + $0x260] sm:$0x7]
      %v302 = vld [vmem:[%s219 + $0x268] sm:$0x7]
      %v303 = vld [vmem:[%s219 + $0x270] sm:$0x7]
      %v304 = vld [vmem:[%s219 + $0x278] sm:$0x7]
      %v305 = vld [vmem:[%s1] sm:$0xff]
      %v306 = vld [vmem:[%s1 + $0x8] sm:$0xff]
      %v307 = vld [vmem:[%s1 + $0x10] sm:$0xff]
      %v308 = vld [vmem:[%s1 + $0x18] sm:$0xff]
      %v309 = vld [vmem:[%s2] sm:$0xff]
      %v310 = vld [vmem:[%s2 + $0x8] sm:$0xff]
      %v311 = vld [vmem:[%s2 + $0x10] sm:$0xff]
      %v312 = vld [vmem:[%s2 + $0x18] sm:$0xff]
      %314 = vset.pattern.permute.xlu0 0
      %315 = vperm.xlu0 %314, %v309
      %v316 = vpop.permute.xlu0 %315
      %319 = vset.pattern.permute.xlu0 0
      %320 = vperm.xlu0 %319, %v310
      %v321 = vpop.permute.xlu0 %320
      %324 = vset.pattern.permute.xlu0 0
      %325 = vperm.xlu0 %324, %v311
      %v326 = vpop.permute.xlu0 %325
      %329 = vset.pattern.permute.xlu0 0
      %330 = vperm.xlu0 %329, %v312
      %v331 = vpop.permute.xlu0 %330
      %vm333 = vcmask 613376
      %v335 = vsel %vm333, %v305, 0
      %v338 = vsel %vm333, %v306, 0
      %v341 = vsel %vm333, %v307, 0
      %v344 = vsel %vm333, %v308, 0
      %vm346 = vcmask 1042432
      %v348 = vsel %vm346, %v297, 0
      %v351 = vsel %vm346, %v298, 0
      %v354 = vsel %vm346, %v299, 0
      %v357 = vsel %vm346, %v300, 0
      %v360 = vsel %vm346, %v301, 0
      %v363 = vsel %vm346, %v302, 0
      %v366 = vsel %vm346, %v303, 0
      %v369 = vsel %vm346, %v304, 0
      %371 = vmatprep.subr.mxu0 %v226
      %372 = vmatpush1.msra.mxu0 %v225
      %373 = vmatprep.subr.mxu0 %v234
      %374 = vmatpush1.msra.mxu0 %v233
      %375 = vmatprep.subr.mxu0 %v242
      %376 = vmatpush1.msra.mxu0 %v241
      %377 = vmatprep.subr.mxu0 %v250
      %378 = vmatpush1.msra.mxu0 %v249
      %379 = vmatprep.subr.mxu0 %v258
      %380 = vmatpush1.msra.mxu0 %v257
      %381 = vmatprep.subr.mxu0 %v266
      %382 = vmatpush1.msra.mxu0 %v265
      %383 = vmatprep.subr.mxu0 %v274
      %384 = vmatpush1.msra.mxu0 %v273
      %385 = vmatprep.subr.mxu0 %v282
      %386 = vmatpush1.msra.mxu0 %v281
      %387 = vmatprep.subr.mxu0 %v290
      %388 = vmatpush1.msra.mxu0 %v289
      %389 = vmatprep.subr.mxu0 %v351
      %390 = vmatpush1.msra.mxu0 %v348
      %391 = vmatprep.subr.mxu0 0.0
      %392 = vmatpush1.msra.mxu0 0.0
      %393 = vmatprep.subr.mxu0 0.0
      %394 = vmatpush1.msra.mxu0 0.0
      %395 = vmatprep.subr.mxu0 0.0
      %396 = vmatpush1.msra.mxu0 0.0
      %397 = vmatprep.subr.mxu0 0.0
      %398 = vmatpush1.msra.mxu0 0.0
      %399 = vmatprep.subr.mxu0 0.0
      %400 = vmatpush1.msra.mxu0 0.0
      %401 = vmatprep.subr.mxu0 0.0
      %402 = vmatpush1.msra.mxu0 0.0
      %403 = vmatprep.subr.mxu0 0.0
      %404 = vmatpush1.msra.mxu0 0.0
      %405 = vmatprep.subr.mxu0 0.0
      %406 = vmatpush1.msra.mxu0 0.0
      %407 = vmatprep.subr.mxu0 0.0
      %408 = vmatpush1.msra.mxu0 0.0
      %409 = vmatprep.subr.mxu0 0.0
      %410 = vmatpush1.msra.mxu0 0.0
      %411 = vmatprep.subr.mxu0 0.0
      %412 = vmatpush1.msra.mxu0 0.0
      %413 = vmatprep.subr.mxu0 0.0
      %414 = vmatpush1.msra.mxu0 0.0
      %415 = vmatprep.subr.mxu0 0.0
      %416 = vmatpush1.msra.mxu0 0.0
      %417 = vmatprep.subr.mxu0 0.0
      %418 = vmatpush1.msra.mxu0 0.0
      %419 = vmatprep.subr.mxu0 0.0
      %420 = vmatpush1.msra.mxu0 0.0
      %421 = vmatprep.subr.mxu0 0.0
      %422 = vmatpush1.msra.mxu0 0.0
      %423 = vmatprep.subr.mxu0 0.0
      %424 = vmatpush1.msra.mxu0 0.0
      %425 = vmatprep.subr.mxu0 0.0
      %426 = vmatpush1.msra.mxu0 0.0
      %427 = vmatprep.subr.mxu0 0.0
      %428 = vmatpush1.msra.mxu0 0.0
      %429 = vmatprep.subr.mxu0 0.0
      %430 = vmatpush1.msra.mxu0 0.0
      %431 = vmatprep.subr.mxu0 0.0
      %432 = vmatpush1.msra.mxu0 0.0
      %433 = vmatprep.subr.mxu0 0.0
      %434 = vmatpush1.msra.mxu0 0.0
      %435 = vmatprep.mubr.f32.mxu0 0.0
      %436 = vmatmul.mubr.f32.gmra.mrb[0].mxu0 %v335
      %v437 = vpop.f32.mrb[0].mxu0
      %v438 = vadd.f32 %v316, %v437
      %v439 = vpop.f32.mrb[0].mxu0
      %v440 = vadd.f32 %v316, %v439
      %441 = vmatprep.mubr.f32.mxu0 0.0
      %442 = vmatmul.mubr.f32.gmra.mrb[0].mxu0 %v338
      %v443 = vpop.f32.mrb[0].mxu0
      %v444 = vadd.f32 %v321, %v443
      %v445 = vpop.f32.mrb[0].mxu0
      %v446 = vadd.f32 %v321, %v445
      %447 = vmatprep.mubr.f32.mxu0 0.0
      %448 = vmatmul.mubr.f32.gmra.mrb[0].mxu0 %v341
      %v449 = vpop.f32.mrb[0].mxu0
      %v450 = vadd.f32 %v326, %v449
      %v451 = vpop.f32.mrb[0].mxu0
      %v452 = vadd.f32 %v326, %v451
      %453 = vmatprep.mubr.f32.mxu0 0.0
      %454 = vmatmul.mubr.f32.gmra.mrb[0].mxu0 %v344
      %v455 = vpop.f32.mrb[0].mxu0
      %v456 = vadd.f32 %v331, %v455
      %v457 = vpop.f32.mrb[0].mxu0
      %v458 = vadd.f32 %v331, %v457
      %459 = vdwg.mxu0
      %460 = vmatprep.subr.mxu0 %v228
      %461 = vmatpush1.msra.mxu0 %v227
      %462 = vmatprep.subr.mxu0 %v236
      %463 = vmatpush1.msra.mxu0 %v235
      %464 = vmatprep.subr.mxu0 %v244
      %465 = vmatpush1.msra.mxu0 %v243
      %466 = vmatprep.subr.mxu0 %v252
      %467 = vmatpush1.msra.mxu0 %v251
      %468 = vmatprep.subr.mxu0 %v260
      %469 = vmatpush1.msra.mxu0 %v259
      %470 = vmatprep.subr.mxu0 %v268
      %471 = vmatpush1.msra.mxu0 %v267
      %472 = vmatprep.subr.mxu0 %v276
      %473 = vmatpush1.msra.mxu0 %v275
      %474 = vmatprep.subr.mxu0 %v284
      %475 = vmatpush1.msra.mxu0 %v283
      %476 = vmatprep.subr.mxu0 %v292
      %477 = vmatpush1.msra.mxu0 %v291
      %478 = vmatprep.subr.mxu0 %v357
      %479 = vmatpush1.msra.mxu0 %v354
      %480 = vmatprep.subr.mxu0 0.0
      %481 = vmatpush1.msra.mxu0 0.0
      %482 = vmatprep.subr.mxu0 0.0
      %483 = vmatpush1.msra.mxu0 0.0
      %484 = vmatprep.subr.mxu0 0.0
      %485 = vmatpush1.msra.mxu0 0.0
      %486 = vmatprep.subr.mxu0 0.0
      %487 = vmatpush1.msra.mxu0 0.0
      %488 = vmatprep.subr.mxu0 0.0
      %489 = vmatpush1.msra.mxu0 0.0
      %490 = vmatprep.subr.mxu0 0.0
      %491 = vmatpush1.msra.mxu0 0.0
      %492 = vmatprep.subr.mxu0 0.0
      %493 = vmatpush1.msra.mxu0 0.0
      %494 = vmatprep.subr.mxu0 0.0
      %495 = vmatpush1.msra.mxu0 0.0
      %496 = vmatprep.subr.mxu0 0.0
      %497 = vmatpush1.msra.mxu0 0.0
      %498 = vmatprep.subr.mxu0 0.0
      %499 = vmatpush1.msra.mxu0 0.0
      %500 = vmatprep.subr.mxu0 0.0
      %501 = vmatpush1.msra.mxu0 0.0
      %502 = vmatprep.subr.mxu0 0.0
      %503 = vmatpush1.msra.mxu0 0.0
      %504 = vmatprep.subr.mxu0 0.0
      %505 = vmatpush1.msra.mxu0 0.0
      %506 = vmatprep.subr.mxu0 0.0
      %507 = vmatpush1.msra.mxu0 0.0
      %508 = vmatprep.subr.mxu0 0.0
      %509 = vmatpush1.msra.mxu0 0.0
      %510 = vmatprep.subr.mxu0 0.0
      %511 = vmatpush1.msra.mxu0 0.0
      %512 = vmatprep.subr.mxu0 0.0
      %513 = vmatpush1.msra.mxu0 0.0
      %514 = vmatprep.subr.mxu0 0.0
      %515 = vmatpush1.msra.mxu0 0.0
      %516 = vmatprep.subr.mxu0 0.0
      %517 = vmatpush1.msra.mxu0 0.0
      %518 = vmatprep.subr.mxu0 0.0
      %519 = vmatpush1.msra.mxu0 0.0
      %520 = vmatprep.subr.mxu0 0.0
      %521 = vmatpush1.msra.mxu0 0.0
      %522 = vmatprep.subr.mxu0 0.0
      %523 = vmatpush1.msra.mxu0 0.0
      %524 = vmatprep.mubr.f32.mxu0 0.0
      %525 = vmatmul.mubr.f32.gmra.mrb[0].mxu0 %v335
      %v526 = vpop.f32.mrb[0].mxu0
      %v527 = vadd.f32 %v316, %v526
      %v528 = vpop.f32.mrb[0].mxu0
      %v529 = vadd.f32 %v316, %v528
      %530 = vmatprep.mubr.f32.mxu0 0.0
      %531 = vmatmul.mubr.f32.gmra.mrb[0].mxu0 %v338
      %v532 = vpop.f32.mrb[0].mxu0
      %v533 = vadd.f32 %v321, %v532
      %v534 = vpop.f32.mrb[0].mxu0
      %v535 = vadd.f32 %v321, %v534
      %536 = vmatprep.mubr.f32.mxu0 0.0
      %537 = vmatmul.mubr.f32.gmra.mrb[0].mxu0 %v341
      %v538 = vpop.f32.mrb[0].mxu0
      %v539 = vadd.f32 %v326, %v538
      %v540 = vpop.f32.mrb[0].mxu0
      %v541 = vadd.f32 %v326, %v540
      %542 = vmatprep.mubr.f32.mxu0 0.0
      %543 = vmatmul.mubr.f32.gmra.mrb[0].mxu0 %v344
      %v544 = vpop.f32.mrb[0].mxu0
      %v545 = vadd.f32 %v331, %v544
      %v546 = vpop.f32.mrb[0].mxu0
      %v547 = vadd.f32 %v331, %v546
      %548 = vdwg.mxu0
      %549 = vmatprep.subr.mxu0 %v230
      %550 = vmatpush1.msra.mxu0 %v229
      %551 = vmatprep.subr.mxu0 %v238
      %552 = vmatpush1.msra.mxu0 %v237
      %553 = vmatprep.subr.mxu0 %v246
      %554 = vmatpush1.msra.mxu0 %v245
      %555 = vmatprep.subr.mxu0 %v254
      %556 = vmatpush1.msra.mxu0 %v253
      %557 = vmatprep.subr.mxu0 %v262
      %558 = vmatpush1.msra.mxu0 %v261
      %559 = vmatprep.subr.mxu0 %v270
      %560 = vmatpush1.msra.mxu0 %v269
      %561 = vmatprep.subr.mxu0 %v278
      %562 = vmatpush1.msra.mxu0 %v277
      %563 = vmatprep.subr.mxu0 %v286
      %564 = vmatpush1.msra.mxu0 %v285
      %565 = vmatprep.subr.mxu0 %v294
      %566 = vmatpush1.msra.mxu0 %v293
      %567 = vmatprep.subr.mxu0 %v363
      %568 = vmatpush1.msra.mxu0 %v360
      %569 = vmatprep.subr.mxu0 0.0
      %570 = vmatpush1.msra.mxu0 0.0
      %571 = vmatprep.subr.mxu0 0.0
      %572 = vmatpush1.msra.mxu0 0.0
      %573 = vmatprep.subr.mxu0 0.0
      %574 = vmatpush1.msra.mxu0 0.0
      %575 = vmatprep.subr.mxu0 0.0
      %576 = vmatpush1.msra.mxu0 0.0
      %577 = vmatprep.subr.mxu0 0.0
      %578 = vmatpush1.msra.mxu0 0.0
      %579 = vmatprep.subr.mxu0 0.0
      %580 = vmatpush1.msra.mxu0 0.0
      %581 = vmatprep.subr.mxu0 0.0
      %582 = vmatpush1.msra.mxu0 0.0
      %583 = vmatprep.subr.mxu0 0.0
      %584 = vmatpush1.msra.mxu0 0.0
      %585 = vmatprep.subr.mxu0 0.0
      %586 = vmatpush1.msra.mxu0 0.0
      %587 = vmatprep.subr.mxu0 0.0
      %588 = vmatpush1.msra.mxu0 0.0
      %589 = vmatprep.subr.mxu0 0.0
      %590 = vmatpush1.msra.mxu0 0.0
      %591 = vmatprep.subr.mxu0 0.0
      %592 = vmatpush1.msra.mxu0 0.0
      %593 = vmatprep.subr.mxu0 0.0
      %594 = vmatpush1.msra.mxu0 0.0
      %595 = vmatprep.subr.mxu0 0.0
      %596 = vmatpush1.msra.mxu0 0.0
      %597 = vmatprep.subr.mxu0 0.0
      %598 = vmatpush1.msra.mxu0 0.0
      %599 = vmatprep.subr.mxu0 0.0
      %600 = vmatpush1.msra.mxu0 0.0
      %601 = vmatprep.subr.mxu0 0.0
      %602 = vmatpush1.msra.mxu0 0.0
      %603 = vmatprep.subr.mxu0 0.0
      %604 = vmatpush1.msra.mxu0 0.0
      %605 = vmatprep.subr.mxu0 0.0
      %606 = vmatpush1.msra.mxu0 0.0
      %607 = vmatprep.subr.mxu0 0.0
      %608 = vmatpush1.msra.mxu0 0.0
      %609 = vmatprep.subr.mxu0 0.0
      %610 = vmatpush1.msra.mxu0 0.0
      %611 = vmatprep.subr.mxu0 0.0
      %612 = vmatpush1.msra.mxu0 0.0
      %613 = vmatprep.mubr.f32.mxu0 0.0
      %614 = vmatmul.mubr.f32.gmra.mrb[0].mxu0 %v335
      %v615 = vpop.f32.mrb[0].mxu0
      %v616 = vadd.f32 %v316, %v615
      %v617 = vpop.f32.mrb[0].mxu0
      %v618 = vadd.f32 %v316, %v617
      %619 = vmatprep.mubr.f32.mxu0 0.0
      %620 = vmatmul.mubr.f32.gmra.mrb[0].mxu0 %v338
      %v621 = vpop.f32.mrb[0].mxu0
      %v622 = vadd.f32 %v321, %v621
      %v623 = vpop.f32.mrb[0].mxu0
      %v624 = vadd.f32 %v321, %v623
      %625 = vmatprep.mubr.f32.mxu0 0.0
      %626 = vmatmul.mubr.f32.gmra.mrb[0].mxu0 %v341
      %v627 = vpop.f32.mrb[0].mxu0
      %v628 = vadd.f32 %v326, %v627
      %v629 = vpop.f32.mrb[0].mxu0
      %v630 = vadd.f32 %v326, %v629
      %631 = vmatprep.mubr.f32.mxu0 0.0
      %632 = vmatmul.mubr.f32.gmra.mrb[0].mxu0 %v344
      %v633 = vpop.f32.mrb[0].mxu0
      %v634 = vadd.f32 %v331, %v633
      %v635 = vpop.f32.mrb[0].mxu0
      %v636 = vadd.f32 %v331, %v635
      %637 = vdwg.mxu0
      %638 = vmatprep.subr.mxu0 %v232
      %639 = vmatpush1.msra.mxu0 %v231
      %640 = vmatprep.subr.mxu0 %v240
      %641 = vmatpush1.msra.mxu0 %v239
      %642 = vmatprep.subr.mxu0 %v248
      %643 = vmatpush1.msra.mxu0 %v247
      %644 = vmatprep.subr.mxu0 %v256
      %645 = vmatpush1.msra.mxu0 %v255
      %646 = vmatprep.subr.mxu0 %v264
      %647 = vmatpush1.msra.mxu0 %v263
      %648 = vmatprep.subr.mxu0 %v272
      %649 = vmatpush1.msra.mxu0 %v271
      %650 = vmatprep.subr.mxu0 %v280
      %651 = vmatpush1.msra.mxu0 %v279
      %652 = vmatprep.subr.mxu0 %v288
      %653 = vmatpush1.msra.mxu0 %v287
      %654 = vmatprep.subr.mxu0 %v296
      %655 = vmatpush1.msra.mxu0 %v295
      %656 = vmatprep.subr.mxu0 %v369
      %657 = vmatpush1.msra.mxu0 %v366
      %658 = vmatprep.subr.mxu0 0.0
      %659 = vmatpush1.msra.mxu0 0.0
      %660 = vmatprep.subr.mxu0 0.0
      %661 = vmatpush1.msra.mxu0 0.0
      %662 = vmatprep.subr.mxu0 0.0
      %663 = vmatpush1.msra.mxu0 0.0
      %664 = vmatprep.subr.mxu0 0.0
      %665 = vmatpush1.msra.mxu0 0.0
      %666 = vmatprep.subr.mxu0 0.0
      %667 = vmatpush1.msra.mxu0 0.0
      %668 = vmatprep.subr.mxu0 0.0
      %669 = vmatpush1.msra.mxu0 0.0
      %670 = vmatprep.subr.mxu0 0.0
      %671 = vmatpush1.msra.mxu0 0.0
      %672 = vmatprep.subr.mxu0 0.0
      %673 = vmatpush1.msra.mxu0 0.0
      %674 = vmatprep.subr.mxu0 0.0
      %675 = vmatpush1.msra.mxu0 0.0
      %676 = vmatprep.subr.mxu0 0.0
      %677 = vmatpush1.msra.mxu0 0.0
      %678 = vmatprep.subr.mxu0 0.0
      %679 = vmatpush1.msra.mxu0 0.0
      %680 = vmatprep.subr.mxu0 0.0
      %681 = vmatpush1.msra.mxu0 0.0
      %682 = vmatprep.subr.mxu0 0.0
      %683 = vmatpush1.msra.mxu0 0.0
      %684 = vmatprep.subr.mxu0 0.0
      %685 = vmatpush1.msra.mxu0 0.0
      %686 = vmatprep.subr.mxu0 0.0
      %687 = vmatpush1.msra.mxu0 0.0
      %688 = vmatprep.subr.mxu0 0.0
      %689 = vmatpush1.msra.mxu0 0.0
      %690 = vmatprep.subr.mxu0 0.0
      %691 = vmatpush1.msra.mxu0 0.0
      %692 = vmatprep.subr.mxu0 0.0
      %693 = vmatpush1.msra.mxu0 0.0
      %694 = vmatprep.subr.mxu0 0.0
      %695 = vmatpush1.msra.mxu0 0.0
      %696 = vmatprep.subr.mxu0 0.0
      %697 = vmatpush1.msra.mxu0 0.0
      %698 = vmatprep.subr.mxu0 0.0
      %699 = vmatpush1.msra.mxu0 0.0
      %700 = vmatprep.subr.mxu0 0.0
      %701 = vmatpush1.msra.mxu0 0.0
      %702 = vmatprep.mubr.f32.mxu0 0.0
      %703 = vmatmul.mubr.f32.gmra.mrb[0].mxu0 %v335
      %v704 = vpop.f32.mrb[0].mxu0
      %v705 = vadd.f32 %v316, %v704
      %v706 = vpop.f32.mrb[0].mxu0
      %v707 = vadd.f32 %v316, %v706
      %708 = vmatprep.mubr.f32.mxu0 0.0
      %709 = vmatmul.mubr.f32.gmra.mrb[0].mxu0 %v338
      %v710 = vpop.f32.mrb[0].mxu0
      %v711 = vadd.f32 %v321, %v710
      %v712 = vpop.f32.mrb[0].mxu0
      %v713 = vadd.f32 %v321, %v712
      %714 = vmatprep.mubr.f32.mxu0 0.0
      %715 = vmatmul.mubr.f32.gmra.mrb[0].mxu0 %v341
      %v716 = vpop.f32.mrb[0].mxu0
      %v717 = vadd.f32 %v326, %v716
      %v718 = vpop.f32.mrb[0].mxu0
      %v719 = vadd.f32 %v326, %v718
      %720 = vmatprep.mubr.f32.mxu0 0.0
      %721 = vmatmul.mubr.f32.gmra.mrb[0].mxu0 %v344
      %v722 = vpop.f32.mrb[0].mxu0
      %v723 = vadd.f32 %v331, %v722
      %v724 = vpop.f32.mrb[0].mxu0
      %v725 = vadd.f32 %v331, %v724
      %726 = vdwg.mxu0
      %v727 = vmax.f32 %v438, 0.0
      %v728 = vmax.f32 %v440, 0.0
      %v729 = vmax.f32 %v527, 0.0
      %v730 = vmax.f32 %v529, 0.0
      %v731 = vmax.f32 %v616, 0.0
      %v732 = vmax.f32 %v618, 0.0
      %v733 = vmax.f32 %v705, 0.0
      %v734 = vmax.f32 %v707, 0.0
      %v735 = vmax.f32 %v444, 0.0
      %v736 = vmax.f32 %v446, 0.0
      %v737 = vmax.f32 %v533, 0.0
      %v738 = vmax.f32 %v535, 0.0
      %v739 = vmax.f32 %v622, 0.0
      %v740 = vmax.f32 %v624, 0.0
      %v741 = vmax.f32 %v711, 0.0
      %v742 = vmax.f32 %v713, 0.0
      %v743 = vmax.f32 %v450, 0.0
      %v744 = vmax.f32 %v452, 0.0
      %v745 = vmax.f32 %v539, 0.0
      %v746 = vmax.f32 %v541, 0.0
      %v747 = vmax.f32 %v628, 0.0
      %v748 = vmax.f32 %v630, 0.0
      %v749 = vmax.f32 %v717, 0.0
      %v750 = vmax.f32 %v719, 0.0
      %v751 = vmax.f32 %v456, 0.0
      %v752 = vmax.f32 %v458, 0.0
      %v753 = vmax.f32 %v545, 0.0
      %v754 = vmax.f32 %v547, 0.0
      %v755 = vmax.f32 %v634, 0.0
      %v756 = vmax.f32 %v636, 0.0
      %v757 = vmax.f32 %v723, 0.0
      %v758 = vmax.f32 %v725, 0.0
      %v759 = vld [vmem:[%s3] sm:$0xff]
      %v760 = vld [vmem:[%s3 + $0x8] sm:$0xff]
      %v761 = vld [vmem:[%s3 + $0x10] sm:$0xff]
      %v762 = vld [vmem:[%s3 + $0x18] sm:$0xff]
      %v763 = vld [vmem:[%s3 + $0x20] sm:$0xff]
      %v764 = vld [vmem:[%s3 + $0x28] sm:$0xff]
      %v765 = vld [vmem:[%s3 + $0x30] sm:$0xff]
      %v766 = vld [vmem:[%s3 + $0x38] sm:$0xff]
      %v767 = vld [vmem:[%s3 + $0x40] sm:$0xff]
      %v768 = vld [vmem:[%s3 + $0x48] sm:$0xff]
      %v769 = vld [vmem:[%s3 + $0x50] sm:$0xff]
      %v770 = vld [vmem:[%s3 + $0x58] sm:$0xff]
      %v771 = vld [vmem:[%s3 + $0x60] sm:$0xff]
      %v772 = vld [vmem:[%s3 + $0x68] sm:$0xff]
      %v773 = vld [vmem:[%s3 + $0x70] sm:$0xff]
      %v774 = vld [vmem:[%s3 + $0x78] sm:$0xff]
      %v775 = vld [vmem:[%s3 + $0x80] sm:$0xff]
      %v776 = vld [vmem:[%s3 + $0x88] sm:$0xff]
      %v777 = vld [vmem:[%s3 + $0x90] sm:$0xff]
      %v778 = vld [vmem:[%s3 + $0x98] sm:$0xff]
      %v779 = vld [vmem:[%s3 + $0xa0] sm:$0xff]
      %v780 = vld [vmem:[%s3 + $0xa8] sm:$0xff]
      %v781 = vld [vmem:[%s3 + $0xb0] sm:$0xff]
      %v782 = vld [vmem:[%s3 + $0xb8] sm:$0xff]
      %v783 = vld [vmem:[%s3 + $0xc0] sm:$0xff]
      %v784 = vld [vmem:[%s3 + $0xc8] sm:$0xff]
      %v785 = vld [vmem:[%s3 + $0xd0] sm:$0xff]
      %v786 = vld [vmem:[%s3 + $0xd8] sm:$0xff]
      %v787 = vld [vmem:[%s3 + $0xe0] sm:$0xff]
      %v788 = vld [vmem:[%s3 + $0xe8] sm:$0xff]
      %v789 = vld [vmem:[%s3 + $0xf0] sm:$0xff]
      %v790 = vld [vmem:[%s3 + $0xf8] sm:$0xff]
      %v791 = vld [vmem:[%s3 + $0x100] sm:$0xff]
      %v792 = vld [vmem:[%s3 + $0x108] sm:$0xff]
      %v793 = vld [vmem:[%s3 + $0x110] sm:$0xff]
      %v794 = vld [vmem:[%s3 + $0x118] sm:$0xff]
      %v795 = vld [vmem:[%s3 + $0x120] sm:$0xff]
      %v796 = vld [vmem:[%s3 + $0x128] sm:$0xff]
      %v797 = vld [vmem:[%s3 + $0x130] sm:$0xff]
      %v798 = vld [vmem:[%s3 + $0x138] sm:$0xff]
      %v799 = vld [vmem:[%s3 + $0x140] sm:$0xff]
      %v800 = vld [vmem:[%s3 + $0x148] sm:$0xff]
      %v801 = vld [vmem:[%s3 + $0x150] sm:$0xff]
      %v802 = vld [vmem:[%s3 + $0x158] sm:$0xff]
      %v803 = vld [vmem:[%s3 + $0x160] sm:$0xff]
      %v804 = vld [vmem:[%s3 + $0x168] sm:$0xff]
      %v805 = vld [vmem:[%s3 + $0x170] sm:$0xff]
      %v806 = vld [vmem:[%s3 + $0x178] sm:$0xff]
      %v807 = vld [vmem:[%s3 + $0x180] sm:$0xff]
      %v808 = vld [vmem:[%s3 + $0x188] sm:$0xff]
      %v809 = vld [vmem:[%s3 + $0x190] sm:$0xff]
      %v810 = vld [vmem:[%s3 + $0x198] sm:$0xff]
      %v811 = vld [vmem:[%s3 + $0x1a0] sm:$0xff]
      %v812 = vld [vmem:[%s3 + $0x1a8] sm:$0xff]
      %v813 = vld [vmem:[%s3 + $0x1b0] sm:$0xff]
      %v814 = vld [vmem:[%s3 + $0x1b8] sm:$0xff]
      %v815 = vld [vmem:[%s3 + $0x1c0] sm:$0xff]
      %v816 = vld [vmem:[%s3 + $0x1c8] sm:$0xff]
      %v817 = vld [vmem:[%s3 + $0x1d0] sm:$0xff]
      %v818 = vld [vmem:[%s3 + $0x1d8] sm:$0xff]
      %v819 = vld [vmem:[%s3 + $0x1e0] sm:$0xff]
      %v820 = vld [vmem:[%s3 + $0x1e8] sm:$0xff]
      %v821 = vld [vmem:[%s3 + $0x1f0] sm:$0xff]
      %v822 = vld [vmem:[%s3 + $0x1f8] sm:$0xff]
      %v823 = vld [vmem:[%s3 + $0x200] sm:$0xff]
      %v824 = vld [vmem:[%s3 + $0x208] sm:$0xff]
      %v825 = vld [vmem:[%s3 + $0x210] sm:$0xff]
      %v826 = vld [vmem:[%s3 + $0x218] sm:$0xff]
      %v827 = vld [vmem:[%s3 + $0x220] sm:$0xff]
      %v828 = vld [vmem:[%s3 + $0x228] sm:$0xff]
      %v829 = vld [vmem:[%s3 + $0x230] sm:$0xff]
      %v830 = vld [vmem:[%s3 + $0x238] sm:$0xff]
      %v831 = vld [vmem:[%s3 + $0x240] sm:$0xff]
      %v832 = vld [vmem:[%s3 + $0x248] sm:$0xff]
      %v833 = vld [vmem:[%s3 + $0x250] sm:$0xff]
      %v834 = vld [vmem:[%s3 + $0x258] sm:$0xff]
      %v835 = vld [vmem:[%s3 + $0x260] sm:$0xff]
      %v836 = vld [vmem:[%s3 + $0x268] sm:$0xff]
      %v837 = vld [vmem:[%s3 + $0x270] sm:$0xff]
      %v838 = vld [vmem:[%s3 + $0x278] sm:$0xff]
      %v839 = vld [vmem:[%s3 + $0x280] sm:$0xff]
      %v840 = vld [vmem:[%s3 + $0x288] sm:$0xff]
      %v841 = vld [vmem:[%s3 + $0x290] sm:$0xff]
      %v842 = vld [vmem:[%s3 + $0x298] sm:$0xff]
      %v843 = vld [vmem:[%s3 + $0x2a0] sm:$0xff]
      %v844 = vld [vmem:[%s3 + $0x2a8] sm:$0xff]
      %v845 = vld [vmem:[%s3 + $0x2b0] sm:$0xff]
      %v846 = vld [vmem:[%s3 + $0x2b8] sm:$0xff]
      %v847 = vld [vmem:[%s3 + $0x2c0] sm:$0xff]
      %v848 = vld [vmem:[%s3 + $0x2c8] sm:$0xff]
      %v849 = vld [vmem:[%s3 + $0x2d0] sm:$0xff]
      %v850 = vld [vmem:[%s3 + $0x2d8] sm:$0xff]
      %v851 = vld [vmem:[%s3 + $0x2e0] sm:$0xff]
      %v852 = vld [vmem:[%s3 + $0x2e8] sm:$0xff]
      %v853 = vld [vmem:[%s3 + $0x2f0] sm:$0xff]
      %v854 = vld [vmem:[%s3 + $0x2f8] sm:$0xff]
      %v855 = vld [vmem:[%s3 + $0x300] sm:$0xff]
      %v856 = vld [vmem:[%s3 + $0x308] sm:$0xff]
      %v857 = vld [vmem:[%s3 + $0x310] sm:$0xff]
      %v858 = vld [vmem:[%s3 + $0x318] sm:$0xff]
      %v859 = vld [vmem:[%s3 + $0x320] sm:$0xff]
      %v860 = vld [vmem:[%s3 + $0x328] sm:$0xff]
      %v861 = vld [vmem:[%s3 + $0x330] sm:$0xff]
      %v862 = vld [vmem:[%s3 + $0x338] sm:$0xff]
      %v863 = vld [vmem:[%s3 + $0x340] sm:$0xff]
      %v864 = vld [vmem:[%s3 + $0x348] sm:$0xff]
      %v865 = vld [vmem:[%s3 + $0x350] sm:$0xff]
      %v866 = vld [vmem:[%s3 + $0x358] sm:$0xff]
      %v867 = vld [vmem:[%s3 + $0x360] sm:$0xff]
      %v868 = vld [vmem:[%s3 + $0x368] sm:$0xff]
      %v869 = vld [vmem:[%s3 + $0x370] sm:$0xff]
      %v870 = vld [vmem:[%s3 + $0x378] sm:$0xff]
      %v871 = vld [vmem:[%s3 + $0x380] sm:$0xff]
      %v872 = vld [vmem:[%s3 + $0x388] sm:$0xff]
      %v873 = vld [vmem:[%s3 + $0x390] sm:$0xff]
      %v874 = vld [vmem:[%s3 + $0x398] sm:$0xff]
      %v875 = vld [vmem:[%s3 + $0x3a0] sm:$0xff]
      %v876 = vld [vmem:[%s3 + $0x3a8] sm:$0xff]
      %v877 = vld [vmem:[%s3 + $0x3b0] sm:$0xff]
      %v878 = vld [vmem:[%s3 + $0x3b8] sm:$0xff]
      %v879 = vld [vmem:[%s3 + $0x3c0] sm:$0xff]
      %v880 = vld [vmem:[%s3 + $0x3c8] sm:$0xff]
      %v881 = vld [vmem:[%s3 + $0x3d0] sm:$0xff]
      %v882 = vld [vmem:[%s3 + $0x3d8] sm:$0xff]
      %v883 = vld [vmem:[%s3 + $0x3e0] sm:$0xff]
      %v884 = vld [vmem:[%s3 + $0x3e8] sm:$0xff]
      %v885 = vld [vmem:[%s3 + $0x3f0] sm:$0xff]
      %v886 = vld [vmem:[%s3 + $0x3f8] sm:$0xff]
      %v887 = vld [vmem:[%s3 + $0x400] sm:$0xff]
      %v888 = vld [vmem:[%s3 + $0x408] sm:$0xff]
      %v889 = vld [vmem:[%s3 + $0x410] sm:$0xff]
      %v890 = vld [vmem:[%s3 + $0x418] sm:$0xff]
      %v891 = vld [vmem:[%s3 + $0x420] sm:$0xff]
      %v892 = vld [vmem:[%s3 + $0x428] sm:$0xff]
      %v893 = vld [vmem:[%s3 + $0x430] sm:$0xff]
      %v894 = vld [vmem:[%s3 + $0x438] sm:$0xff]
      %v895 = vld [vmem:[%s3 + $0x440] sm:$0xff]
      %v896 = vld [vmem:[%s3 + $0x448] sm:$0xff]
      %v897 = vld [vmem:[%s3 + $0x450] sm:$0xff]
      %v898 = vld [vmem:[%s3 + $0x458] sm:$0xff]
      %v899 = vld [vmem:[%s3 + $0x460] sm:$0xff]
      %v900 = vld [vmem:[%s3 + $0x468] sm:$0xff]
      %v901 = vld [vmem:[%s3 + $0x470] sm:$0xff]
      %v902 = vld [vmem:[%s3 + $0x478] sm:$0xff]
      %v903 = vld [vmem:[%s3 + $0x480] sm:$0xff]
      %v904 = vld [vmem:[%s3 + $0x488] sm:$0xff]
      %v905 = vld [vmem:[%s3 + $0x490] sm:$0xff]
      %v906 = vld [vmem:[%s3 + $0x498] sm:$0xff]
      %v907 = vld [vmem:[%s3 + $0x4a0] sm:$0xff]
      %v908 = vld [vmem:[%s3 + $0x4a8] sm:$0xff]
      %v909 = vld [vmem:[%s3 + $0x4b0] sm:$0xff]
      %v910 = vld [vmem:[%s3 + $0x4b8] sm:$0xff]
      %v911 = vld [vmem:[%s3 + $0x4c0] sm:$0xff]
      %v912 = vld [vmem:[%s3 + $0x4c8] sm:$0xff]
      %v913 = vld [vmem:[%s3 + $0x4d0] sm:$0xff]
      %v914 = vld [vmem:[%s3 + $0x4d8] sm:$0xff]
      %v915 = vld [vmem:[%s3 + $0x4e0] sm:$0xff]
      %v916 = vld [vmem:[%s3 + $0x4e8] sm:$0xff]
      %v917 = vld [vmem:[%s3 + $0x4f0] sm:$0xff]
      %v918 = vld [vmem:[%s3 + $0x4f8] sm:$0xff]
      %v919 = vld [vmem:[%s3 + $0x500] sm:$0xff]
      %v920 = vld [vmem:[%s3 + $0x508] sm:$0xff]
      %v921 = vld [vmem:[%s3 + $0x510] sm:$0xff]
      %v922 = vld [vmem:[%s3 + $0x518] sm:$0xff]
      %v923 = vld [vmem:[%s3 + $0x520] sm:$0xff]
      %v924 = vld [vmem:[%s3 + $0x528] sm:$0xff]
      %v925 = vld [vmem:[%s3 + $0x530] sm:$0xff]
      %v926 = vld [vmem:[%s3 + $0x538] sm:$0xff]
      %v927 = vld [vmem:[%s3 + $0x540] sm:$0xff]
      %v928 = vld [vmem:[%s3 + $0x548] sm:$0xff]
      %v929 = vld [vmem:[%s3 + $0x550] sm:$0xff]
      %v930 = vld [vmem:[%s3 + $0x558] sm:$0xff]
      %v931 = vld [vmem:[%s3 + $0x560] sm:$0xff]
      %v932 = vld [vmem:[%s3 + $0x568] sm:$0xff]
      %v933 = vld [vmem:[%s3 + $0x570] sm:$0xff]
      %v934 = vld [vmem:[%s3 + $0x578] sm:$0xff]
      %v935 = vld [vmem:[%s3 + $0x580] sm:$0xff]
      %v936 = vld [vmem:[%s3 + $0x588] sm:$0xff]
      %v937 = vld [vmem:[%s3 + $0x590] sm:$0xff]
      %v938 = vld [vmem:[%s3 + $0x598] sm:$0xff]
      %v939 = vld [vmem:[%s3 + $0x5a0] sm:$0xff]
      %v940 = vld [vmem:[%s3 + $0x5a8] sm:$0xff]
      %v941 = vld [vmem:[%s3 + $0x5b0] sm:$0xff]
      %v942 = vld [vmem:[%s3 + $0x5b8] sm:$0xff]
      %v943 = vld [vmem:[%s3 + $0x5c0] sm:$0xff]
      %v944 = vld [vmem:[%s3 + $0x5c8] sm:$0xff]
      %v945 = vld [vmem:[%s3 + $0x5d0] sm:$0xff]
      %v946 = vld [vmem:[%s3 + $0x5d8] sm:$0xff]
      %v947 = vld [vmem:[%s3 + $0x5e0] sm:$0xff]
      %v948 = vld [vmem:[%s3 + $0x5e8] sm:$0xff]
      %v949 = vld [vmem:[%s3 + $0x5f0] sm:$0xff]
      %v950 = vld [vmem:[%s3 + $0x5f8] sm:$0xff]
      %v951 = vld [vmem:[%s3 + $0x600] sm:$0xff]
      %v952 = vld [vmem:[%s3 + $0x608] sm:$0xff]
      %v953 = vld [vmem:[%s3 + $0x610] sm:$0xff]
      %v954 = vld [vmem:[%s3 + $0x618] sm:$0xff]
      %v955 = vld [vmem:[%s3 + $0x620] sm:$0xff]
      %v956 = vld [vmem:[%s3 + $0x628] sm:$0xff]
      %v957 = vld [vmem:[%s3 + $0x630] sm:$0xff]
      %v958 = vld [vmem:[%s3 + $0x638] sm:$0xff]
      %v959 = vld [vmem:[%s3 + $0x640] sm:$0xff]
      %v960 = vld [vmem:[%s3 + $0x648] sm:$0xff]
      %v961 = vld [vmem:[%s3 + $0x650] sm:$0xff]
      %v962 = vld [vmem:[%s3 + $0x658] sm:$0xff]
      %v963 = vld [vmem:[%s3 + $0x660] sm:$0xff]
      %v964 = vld [vmem:[%s3 + $0x668] sm:$0xff]
      %v965 = vld [vmem:[%s3 + $0x670] sm:$0xff]
      %v966 = vld [vmem:[%s3 + $0x678] sm:$0xff]
      %v967 = vld [vmem:[%s3 + $0x680] sm:$0xff]
      %v968 = vld [vmem:[%s3 + $0x688] sm:$0xff]
      %v969 = vld [vmem:[%s3 + $0x690] sm:$0xff]
      %v970 = vld [vmem:[%s3 + $0x698] sm:$0xff]
      %v971 = vld [vmem:[%s3 + $0x6a0] sm:$0xff]
      %v972 = vld [vmem:[%s3 + $0x6a8] sm:$0xff]
      %v973 = vld [vmem:[%s3 + $0x6b0] sm:$0xff]
      %v974 = vld [vmem:[%s3 + $0x6b8] sm:$0xff]
      %v975 = vld [vmem:[%s3 + $0x6c0] sm:$0xff]
      %v976 = vld [vmem:[%s3 + $0x6c8] sm:$0xff]
      %v977 = vld [vmem:[%s3 + $0x6d0] sm:$0xff]
      %v978 = vld [vmem:[%s3 + $0x6d8] sm:$0xff]
      %v979 = vld [vmem:[%s3 + $0x6e0] sm:$0xff]
      %v980 = vld [vmem:[%s3 + $0x6e8] sm:$0xff]
      %v981 = vld [vmem:[%s3 + $0x6f0] sm:$0xff]
      %v982 = vld [vmem:[%s3 + $0x6f8] sm:$0xff]
      %v983 = vld [vmem:[%s3 + $0x700] sm:$0xff]
      %v984 = vld [vmem:[%s3 + $0x708] sm:$0xff]
      %v985 = vld [vmem:[%s3 + $0x710] sm:$0xff]
      %v986 = vld [vmem:[%s3 + $0x718] sm:$0xff]
      %v987 = vld [vmem:[%s3 + $0x720] sm:$0xff]
      %v988 = vld [vmem:[%s3 + $0x728] sm:$0xff]
      %v989 = vld [vmem:[%s3 + $0x730] sm:$0xff]
      %v990 = vld [vmem:[%s3 + $0x738] sm:$0xff]
      %v991 = vld [vmem:[%s3 + $0x740] sm:$0xff]
      %v992 = vld [vmem:[%s3 + $0x748] sm:$0xff]
      %v993 = vld [vmem:[%s3 + $0x750] sm:$0xff]
      %v994 = vld [vmem:[%s3 + $0x758] sm:$0xff]
      %v995 = vld [vmem:[%s3 + $0x760] sm:$0xff]
      %v996 = vld [vmem:[%s3 + $0x768] sm:$0xff]
      %v997 = vld [vmem:[%s3 + $0x770] sm:$0xff]
      %v998 = vld [vmem:[%s3 + $0x778] sm:$0xff]
      %v999 = vld [vmem:[%s3 + $0x780] sm:$0xff]
      %v1000 = vld [vmem:[%s3 + $0x788] sm:$0xff]
      %v1001 = vld [vmem:[%s3 + $0x790] sm:$0xff]
      %v1002 = vld [vmem:[%s3 + $0x798] sm:$0xff]
      %v1003 = vld [vmem:[%s3 + $0x7a0] sm:$0xff]
      %v1004 = vld [vmem:[%s3 + $0x7a8] sm:$0xff]
      %v1005 = vld [vmem:[%s3 + $0x7b0] sm:$0xff]
      %v1006 = vld [vmem:[%s3 + $0x7b8] sm:$0xff]
      %v1007 = vld [vmem:[%s3 + $0x7c0] sm:$0xff]
      %v1008 = vld [vmem:[%s3 + $0x7c8] sm:$0xff]
      %v1009 = vld [vmem:[%s3 + $0x7d0] sm:$0xff]
      %v1010 = vld [vmem:[%s3 + $0x7d8] sm:$0xff]
      %v1011 = vld [vmem:[%s3 + $0x7e0] sm:$0xff]
      %v1012 = vld [vmem:[%s3 + $0x7e8] sm:$0xff]
      %v1013 = vld [vmem:[%s3 + $0x7f0] sm:$0xff]
      %v1014 = vld [vmem:[%s3 + $0x7f8] sm:$0xff]
      %v1015 = vld [vmem:[%s3 + $0x800] sm:$0xff]
      %v1016 = vld [vmem:[%s3 + $0x808] sm:$0xff]
      %v1017 = vld [vmem:[%s3 + $0x810] sm:$0xff]
      %v1018 = vld [vmem:[%s3 + $0x818] sm:$0xff]
      %v1019 = vld [vmem:[%s3 + $0x820] sm:$0xff]
      %v1020 = vld [vmem:[%s3 + $0x828] sm:$0xff]
      %v1021 = vld [vmem:[%s3 + $0x830] sm:$0xff]
      %v1022 = vld [vmem:[%s3 + $0x838] sm:$0xff]
      %v1023 = vld [vmem:[%s3 + $0x840] sm:$0xff]
      %v1024 = vld [vmem:[%s3 + $0x848] sm:$0xff]
      %v1025 = vld [vmem:[%s3 + $0x850] sm:$0xff]
      %v1026 = vld [vmem:[%s3 + $0x858] sm:$0xff]
      %v1027 = vld [vmem:[%s3 + $0x860] sm:$0xff]
      %v1028 = vld [vmem:[%s3 + $0x868] sm:$0xff]
      %v1029 = vld [vmem:[%s3 + $0x870] sm:$0xff]
      %v1030 = vld [vmem:[%s3 + $0x878] sm:$0xff]
      %v1031 = vld [vmem:[%s3 + $0x880] sm:$0xff]
      %v1032 = vld [vmem:[%s3 + $0x888] sm:$0xff]
      %v1033 = vld [vmem:[%s3 + $0x890] sm:$0xff]
      %v1034 = vld [vmem:[%s3 + $0x898] sm:$0xff]
      %v1035 = vld [vmem:[%s3 + $0x8a0] sm:$0xff]
      %v1036 = vld [vmem:[%s3 + $0x8a8] sm:$0xff]
      %v1037 = vld [vmem:[%s3 + $0x8b0] sm:$0xff]
      %v1038 = vld [vmem:[%s3 + $0x8b8] sm:$0xff]
      %v1039 = vld [vmem:[%s3 + $0x8c0] sm:$0xff]
      %v1040 = vld [vmem:[%s3 + $0x8c8] sm:$0xff]
      %v1041 = vld [vmem:[%s3 + $0x8d0] sm:$0xff]
      %v1042 = vld [vmem:[%s3 + $0x8d8] sm:$0xff]
      %v1043 = vld [vmem:[%s3 + $0x8e0] sm:$0xff]
      %v1044 = vld [vmem:[%s3 + $0x8e8] sm:$0xff]
      %v1045 = vld [vmem:[%s3 + $0x8f0] sm:$0xff]
      %v1046 = vld [vmem:[%s3 + $0x8f8] sm:$0xff]
      %v1047 = vld [vmem:[%s3 + $0x900] sm:$0xff]
      %v1048 = vld [vmem:[%s3 + $0x908] sm:$0xff]
      %v1049 = vld [vmem:[%s3 + $0x910] sm:$0xff]
      %v1050 = vld [vmem:[%s3 + $0x918] sm:$0xff]
      %v1051 = vld [vmem:[%s3 + $0x920] sm:$0xff]
      %v1052 = vld [vmem:[%s3 + $0x928] sm:$0xff]
      %v1053 = vld [vmem:[%s3 + $0x930] sm:$0xff]
      %v1054 = vld [vmem:[%s3 + $0x938] sm:$0xff]
      %v1055 = vld [vmem:[%s3 + $0x940] sm:$0xff]
      %v1056 = vld [vmem:[%s3 + $0x948] sm:$0xff]
      %v1057 = vld [vmem:[%s3 + $0x950] sm:$0xff]
      %v1058 = vld [vmem:[%s3 + $0x958] sm:$0xff]
      %v1059 = vld [vmem:[%s3 + $0x960] sm:$0xff]
      %v1060 = vld [vmem:[%s3 + $0x968] sm:$0xff]
      %v1061 = vld [vmem:[%s3 + $0x970] sm:$0xff]
      %v1062 = vld [vmem:[%s3 + $0x978] sm:$0xff]
      %v1063 = vld [vmem:[%s3 + $0x980] sm:$0xff]
      %v1064 = vld [vmem:[%s3 + $0x988] sm:$0xff]
      %v1065 = vld [vmem:[%s3 + $0x990] sm:$0xff]
      %v1066 = vld [vmem:[%s3 + $0x998] sm:$0xff]
      %v1067 = vld [vmem:[%s3 + $0x9a0] sm:$0xff]
      %v1068 = vld [vmem:[%s3 + $0x9a8] sm:$0xff]
      %v1069 = vld [vmem:[%s3 + $0x9b0] sm:$0xff]
      %v1070 = vld [vmem:[%s3 + $0x9b8] sm:$0xff]
      %v1071 = vld [vmem:[%s3 + $0x9c0] sm:$0xff]
      %v1072 = vld [vmem:[%s3 + $0x9c8] sm:$0xff]
      %v1073 = vld [vmem:[%s3 + $0x9d0] sm:$0xff]
      %v1074 = vld [vmem:[%s3 + $0x9d8] sm:$0xff]
      %v1075 = vld [vmem:[%s3 + $0x9e0] sm:$0xff]
      %v1076 = vld [vmem:[%s3 + $0x9e8] sm:$0xff]
      %v1077 = vld [vmem:[%s3 + $0x9f0] sm:$0xff]
      %v1078 = vld [vmem:[%s3 + $0x9f8] sm:$0xff]
      %v1079 = vmul.f32 %v759, %v727
      %v1080 = vmul.f32 %v760, %v728
      %v1081 = vmul.f32 %v761, %v729
      %v1082 = vmul.f32 %v762, %v730
      %v1083 = vmul.f32 %v763, %v731
      %v1084 = vmul.f32 %v764, %v732
      %v1085 = vmul.f32 %v765, %v733
      %v1086 = vmul.f32 %v766, %v734
      %v1087 = vmul.f32 %v767, %v735
      %v1088 = vmul.f32 %v768, %v736
      %v1089 = vmul.f32 %v769, %v737
      %v1090 = vmul.f32 %v770, %v738
      %v1091 = vmul.f32 %v771, %v739
      %v1092 = vmul.f32 %v772, %v740
      %v1093 = vmul.f32 %v773, %v741
      %v1094 = vmul.f32 %v774, %v742
      %v1095 = vmul.f32 %v775, %v743
      %v1096 = vmul.f32 %v776, %v744
      %v1097 = vmul.f32 %v777, %v745
      %v1098 = vmul.f32 %v778, %v746
      %v1099 = vmul.f32 %v779, %v747
      %v1100 = vmul.f32 %v780, %v748
      %v1101 = vmul.f32 %v781, %v749
      %v1102 = vmul.f32 %v782, %v750
      %v1103 = vmul.f32 %v783, %v751
      %v1104 = vmul.f32 %v784, %v752
      %v1105 = vmul.f32 %v785, %v753
      %v1106 = vmul.f32 %v786, %v754
      %v1107 = vmul.f32 %v787, %v755
      %v1108 = vmul.f32 %v788, %v756
      %v1109 = vmul.f32 %v789, %v757
      %v1110 = vmul.f32 %v790, %v758
      %v1111 = vmul.f32 %v791, %v727
      %v1112 = vmul.f32 %v792, %v728
      %v1113 = vmul.f32 %v793, %v729
      %v1114 = vmul.f32 %v794, %v730
      %v1115 = vmul.f32 %v795, %v731
      %v1116 = vmul.f32 %v796, %v732
      %v1117 = vmul.f32 %v797, %v733
      %v1118 = vmul.f32 %v798, %v734
      %v1119 = vmul.f32 %v799, %v735
      %v1120 = vmul.f32 %v800, %v736
      %v1121 = vmul.f32 %v801, %v737
      %v1122 = vmul.f32 %v802, %v738
      %v1123 = vmul.f32 %v803, %v739
      %v1124 = vmul.f32 %v804, %v740
      %v1125 = vmul.f32 %v805, %v741
      %v1126 = vmul.f32 %v806, %v742
      %v1127 = vmul.f32 %v807, %v743
      %v1128 = vmul.f32 %v808, %v744
      %v1129 = vmul.f32 %v809, %v745
      %v1130 = vmul.f32 %v810, %v746
      %v1131 = vmul.f32 %v811, %v747
      %v1132 = vmul.f32 %v812, %v748
      %v1133 = vmul.f32 %v813, %v749
      %v1134 = vmul.f32 %v814, %v750
      %v1135 = vmul.f32 %v815, %v751
      %v1136 = vmul.f32 %v816, %v752
      %v1137 = vmul.f32 %v817, %v753
      %v1138 = vmul.f32 %v818, %v754
      %v1139 = vmul.f32 %v819, %v755
      %v1140 = vmul.f32 %v820, %v756
      %v1141 = vmul.f32 %v821, %v757
      %v1142 = vmul.f32 %v822, %v758
      %v1143 = vmul.f32 %v823, %v727
      %v1144 = vmul.f32 %v824, %v728
      %v1145 = vmul.f32 %v825, %v729
      %v1146 = vmul.f32 %v826, %v730
      %v1147 = vmul.f32 %v827, %v731
      %v1148 = vmul.f32 %v828, %v732
      %v1149 = vmul.f32 %v829, %v733
      %v1150 = vmul.f32 %v830, %v734
      %v1151 = vmul.f32 %v831, %v735
      %v1152 = vmul.f32 %v832, %v736
      %v1153 = vmul.f32 %v833, %v737
      %v1154 = vmul.f32 %v834, %v738
      %v1155 = vmul.f32 %v835, %v739
      %v1156 = vmul.f32 %v836, %v740
      %v1157 = vmul.f32 %v837, %v741
      %v1158 = vmul.f32 %v838, %v742
      %v1159 = vmul.f32 %v839, %v743
      %v1160 = vmul.f32 %v840, %v744
      %v1161 = vmul.f32 %v841, %v745
      %v1162 = vmul.f32 %v842, %v746
      %v1163 = vmul.f32 %v843, %v747
      %v1164 = vmul.f32 %v844, %v748
      %v1165 = vmul.f32 %v845, %v749
      %v1166 = vmul.f32 %v846, %v750
      %v1167 = vmul.f32 %v847, %v751
      %v1168 = vmul.f32 %v848, %v752
      %v1169 = vmul.f32 %v849, %v753
      %v1170 = vmul.f32 %v850, %v754
      %v1171 = vmul.f32 %v851, %v755
      %v1172 = vmul.f32 %v852, %v756
      %v1173 = vmul.f32 %v853, %v757
      %v1174 = vmul.f32 %v854, %v758
      %v1175 = vmul.f32 %v855, %v727
      %v1176 = vmul.f32 %v856, %v728
      %v1177 = vmul.f32 %v857, %v729
      %v1178 = vmul.f32 %v858, %v730
      %v1179 = vmul.f32 %v859, %v731
      %v1180 = vmul.f32 %v860, %v732
      %v1181 = vmul.f32 %v861, %v733
      %v1182 = vmul.f32 %v862, %v734
      %v1183 = vmul.f32 %v863, %v735
      %v1184 = vmul.f32 %v864, %v736
      %v1185 = vmul.f32 %v865, %v737
      %v1186 = vmul.f32 %v866, %v738
      %v1187 = vmul.f32 %v867, %v739
      %v1188 = vmul.f32 %v868, %v740
      %v1189 = vmul.f32 %v869, %v741
      %v1190 = vmul.f32 %v870, %v742
      %v1191 = vmul.f32 %v871, %v743
      %v1192 = vmul.f32 %v872, %v744
      %v1193 = vmul.f32 %v873, %v745
      %v1194 = vmul.f32 %v874, %v746
      %v1195 = vmul.f32 %v875, %v747
      %v1196 = vmul.f32 %v876, %v748
      %v1197 = vmul.f32 %v877, %v749
      %v1198 = vmul.f32 %v878, %v750
      %v1199 = vmul.f32 %v879, %v751
      %v1200 = vmul.f32 %v880, %v752
      %v1201 = vmul.f32 %v881, %v753
      %v1202 = vmul.f32 %v882, %v754
      %v1203 = vmul.f32 %v883, %v755
      %v1204 = vmul.f32 %v884, %v756
      %v1205 = vmul.f32 %v885, %v757
      %v1206 = vmul.f32 %v886, %v758
      %v1207 = vmul.f32 %v887, %v727
      %v1208 = vmul.f32 %v888, %v728
      %v1209 = vmul.f32 %v889, %v729
      %v1210 = vmul.f32 %v890, %v730
      %v1211 = vmul.f32 %v891, %v731
      %v1212 = vmul.f32 %v892, %v732
      %v1213 = vmul.f32 %v893, %v733
      %v1214 = vmul.f32 %v894, %v734
      %v1215 = vmul.f32 %v895, %v735
      %v1216 = vmul.f32 %v896, %v736
      %v1217 = vmul.f32 %v897, %v737
      %v1218 = vmul.f32 %v898, %v738
      %v1219 = vmul.f32 %v899, %v739
      %v1220 = vmul.f32 %v900, %v740
      %v1221 = vmul.f32 %v901, %v741
      %v1222 = vmul.f32 %v902, %v742
      %v1223 = vmul.f32 %v903, %v743
      %v1224 = vmul.f32 %v904, %v744
      %v1225 = vmul.f32 %v905, %v745
      %v1226 = vmul.f32 %v906, %v746
      %v1227 = vmul.f32 %v907, %v747
      %v1228 = vmul.f32 %v908, %v748
      %v1229 = vmul.f32 %v909, %v749
      %v1230 = vmul.f32 %v910, %v750
      %v1231 = vmul.f32 %v911, %v751
      %v1232 = vmul.f32 %v912, %v752
      %v1233 = vmul.f32 %v913, %v753
      %v1234 = vmul.f32 %v914, %v754
      %v1235 = vmul.f32 %v915, %v755
      %v1236 = vmul.f32 %v916, %v756
      %v1237 = vmul.f32 %v917, %v757
      %v1238 = vmul.f32 %v918, %v758
      %v1239 = vmul.f32 %v919, %v727
      %v1240 = vmul.f32 %v920, %v728
      %v1241 = vmul.f32 %v921, %v729
      %v1242 = vmul.f32 %v922, %v730
      %v1243 = vmul.f32 %v923, %v731
      %v1244 = vmul.f32 %v924, %v732
      %v1245 = vmul.f32 %v925, %v733
      %v1246 = vmul.f32 %v926, %v734
      %v1247 = vmul.f32 %v927, %v735
      %v1248 = vmul.f32 %v928, %v736
      %v1249 = vmul.f32 %v929, %v737
      %v1250 = vmul.f32 %v930, %v738
      %v1251 = vmul.f32 %v931, %v739
      %v1252 = vmul.f32 %v932, %v740
      %v1253 = vmul.f32 %v933, %v741
      %v1254 = vmul.f32 %v934, %v742
      %v1255 = vmul.f32 %v935, %v743
      %v1256 = vmul.f32 %v936, %v744
      %v1257 = vmul.f32 %v937, %v745
      %v1258 = vmul.f32 %v938, %v746
      %v1259 = vmul.f32 %v939, %v747
      %v1260 = vmul.f32 %v940, %v748
      %v1261 = vmul.f32 %v941, %v749
      %v1262 = vmul.f32 %v942, %v750
      %v1263 = vmul.f32 %v943, %v751
      %v1264 = vmul.f32 %v944, %v752
      %v1265 = vmul.f32 %v945, %v753
      %v1266 = vmul.f32 %v946, %v754
      %v1267 = vmul.f32 %v947, %v755
      %v1268 = vmul.f32 %v948, %v756
      %v1269 = vmul.f32 %v949, %v757
      %v1270 = vmul.f32 %v950, %v758
      %v1271 = vmul.f32 %v951, %v727
      %v1272 = vmul.f32 %v952, %v728
      %v1273 = vmul.f32 %v953, %v729
      %v1274 = vmul.f32 %v954, %v730
      %v1275 = vmul.f32 %v955, %v731
      %v1276 = vmul.f32 %v956, %v732
      %v1277 = vmul.f32 %v957, %v733
      %v1278 = vmul.f32 %v958, %v734
      %v1279 = vmul.f32 %v959, %v735
      %v1280 = vmul.f32 %v960, %v736
      %v1281 = vmul.f32 %v961, %v737
      %v1282 = vmul.f32 %v962, %v738
      %v1283 = vmul.f32 %v963, %v739
      %v1284 = vmul.f32 %v964, %v740
      %v1285 = vmul.f32 %v965, %v741
      %v1286 = vmul.f32 %v966, %v742
      %v1287 = vmul.f32 %v967, %v743
      %v1288 = vmul.f32 %v968, %v744
      %v1289 = vmul.f32 %v969, %v745
      %v1290 = vmul.f32 %v970, %v746
      %v1291 = vmul.f32 %v971, %v747
      %v1292 = vmul.f32 %v972, %v748
      %v1293 = vmul.f32 %v973, %v749
      %v1294 = vmul.f32 %v974, %v750
      %v1295 = vmul.f32 %v975, %v751
      %v1296 = vmul.f32 %v976, %v752
      %v1297 = vmul.f32 %v977, %v753
      %v1298 = vmul.f32 %v978, %v754
      %v1299 = vmul.f32 %v979, %v755
      %v1300 = vmul.f32 %v980, %v756
      %v1301 = vmul.f32 %v981, %v757
      %v1302 = vmul.f32 %v982, %v758
      %v1303 = vmul.f32 %v983, %v727
      %v1304 = vmul.f32 %v984, %v728
      %v1305 = vmul.f32 %v985, %v729
      %v1306 = vmul.f32 %v986, %v730
      %v1307 = vmul.f32 %v987, %v731
      %v1308 = vmul.f32 %v988, %v732
      %v1309 = vmul.f32 %v989, %v733
      %v1310 = vmul.f32 %v990, %v734
      %v1311 = vmul.f32 %v991, %v735
      %v1312 = vmul.f32 %v992, %v736
      %v1313 = vmul.f32 %v993, %v737
      %v1314 = vmul.f32 %v994, %v738
      %v1315 = vmul.f32 %v995, %v739
      %v1316 = vmul.f32 %v996, %v740
      %v1317 = vmul.f32 %v997, %v741
      %v1318 = vmul.f32 %v998, %v742
      %v1319 = vmul.f32 %v999, %v743
      %v1320 = vmul.f32 %v1000, %v744
      %v1321 = vmul.f32 %v1001, %v745
      %v1322 = vmul.f32 %v1002, %v746
      %v1323 = vmul.f32 %v1003, %v747
      %v1324 = vmul.f32 %v1004, %v748
      %v1325 = vmul.f32 %v1005, %v749
      %v1326 = vmul.f32 %v1006, %v750
      %v1327 = vmul.f32 %v1007, %v751
      %v1328 = vmul.f32 %v1008, %v752
      %v1329 = vmul.f32 %v1009, %v753
      %v1330 = vmul.f32 %v1010, %v754
      %v1331 = vmul.f32 %v1011, %v755
      %v1332 = vmul.f32 %v1012, %v756
      %v1333 = vmul.f32 %v1013, %v757
      %v1334 = vmul.f32 %v1014, %v758
      %v1335 = vmul.f32 %v1015, %v727
      %v1336 = vmul.f32 %v1016, %v728
      %v1337 = vmul.f32 %v1017, %v729
      %v1338 = vmul.f32 %v1018, %v730
      %v1339 = vmul.f32 %v1019, %v731
      %v1340 = vmul.f32 %v1020, %v732
      %v1341 = vmul.f32 %v1021, %v733
      %v1342 = vmul.f32 %v1022, %v734
      %v1343 = vmul.f32 %v1023, %v735
      %v1344 = vmul.f32 %v1024, %v736
      %v1345 = vmul.f32 %v1025, %v737
      %v1346 = vmul.f32 %v1026, %v738
      %v1347 = vmul.f32 %v1027, %v739
      %v1348 = vmul.f32 %v1028, %v740
      %v1349 = vmul.f32 %v1029, %v741
      %v1350 = vmul.f32 %v1030, %v742
      %v1351 = vmul.f32 %v1031, %v743
      %v1352 = vmul.f32 %v1032, %v744
      %v1353 = vmul.f32 %v1033, %v745
      %v1354 = vmul.f32 %v1034, %v746
      %v1355 = vmul.f32 %v1035, %v747
      %v1356 = vmul.f32 %v1036, %v748
      %v1357 = vmul.f32 %v1037, %v749
      %v1358 = vmul.f32 %v1038, %v750
      %v1359 = vmul.f32 %v1039, %v751
      %v1360 = vmul.f32 %v1040, %v752
      %v1361 = vmul.f32 %v1041, %v753
      %v1362 = vmul.f32 %v1042, %v754
      %v1363 = vmul.f32 %v1043, %v755
      %v1364 = vmul.f32 %v1044, %v756
      %v1365 = vmul.f32 %v1045, %v757
      %v1366 = vmul.f32 %v1046, %v758
      %v1367 = vmul.f32 %v1047, %v727
      %v1368 = vmul.f32 %v1048, %v728
      %v1369 = vmul.f32 %v1049, %v729
      %v1370 = vmul.f32 %v1050, %v730
      %v1371 = vmul.f32 %v1051, %v731
      %v1372 = vmul.f32 %v1052, %v732
      %v1373 = vmul.f32 %v1053, %v733
      %v1374 = vmul.f32 %v1054, %v734
      %v1375 = vmul.f32 %v1055, %v735
      %v1376 = vmul.f32 %v1056, %v736
      %v1377 = vmul.f32 %v1057, %v737
      %v1378 = vmul.f32 %v1058, %v738
      %v1379 = vmul.f32 %v1059, %v739
      %v1380 = vmul.f32 %v1060, %v740
      %v1381 = vmul.f32 %v1061, %v741
      %v1382 = vmul.f32 %v1062, %v742
      %v1383 = vmul.f32 %v1063, %v743
      %v1384 = vmul.f32 %v1064, %v744
      %v1385 = vmul.f32 %v1065, %v745
      %v1386 = vmul.f32 %v1066, %v746
      %v1387 = vmul.f32 %v1067, %v747
      %v1388 = vmul.f32 %v1068, %v748
      %v1389 = vmul.f32 %v1069, %v749
      %v1390 = vmul.f32 %v1070, %v750
      %v1391 = vmul.f32 %v1071, %v751
      %v1392 = vmul.f32 %v1072, %v752
      %v1393 = vmul.f32 %v1073, %v753
      %v1394 = vmul.f32 %v1074, %v754
      %v1395 = vmul.f32 %v1075, %v755
      %v1396 = vmul.f32 %v1076, %v756
      %v1397 = vmul.f32 %v1077, %v757
      %v1398 = vmul.f32 %v1078, %v758
      %v1399 = vadd.f32 %v1079, %v1080
      %v1400 = vadd.f32 %v1399, %v1081
      %v1401 = vadd.f32 %v1400, %v1082
      %v1402 = vadd.f32 %v1401, %v1083
      %v1403 = vadd.f32 %v1402, %v1084
      %v1404 = vadd.f32 %v1403, %v1085
      %v1405 = vadd.f32 %v1404, %v1086
      %1406 = vadd.xlane.f32.xlu0 %v1405
      %v1407 = vpop.xlane.xlu0 %1406
      %v1408 = vadd.f32 %v1087, %v1088
      %v1409 = vadd.f32 %v1408, %v1089
      %v1410 = vadd.f32 %v1409, %v1090
      %v1411 = vadd.f32 %v1410, %v1091
      %v1412 = vadd.f32 %v1411, %v1092
      %v1413 = vadd.f32 %v1412, %v1093
      %v1414 = vadd.f32 %v1413, %v1094
      %1415 = vadd.xlane.f32.xlu0 %v1414
      %v1416 = vpop.xlane.xlu0 %1415
      %v1417 = vadd.f32 %v1095, %v1096
      %v1418 = vadd.f32 %v1417, %v1097
      %v1419 = vadd.f32 %v1418, %v1098
      %v1420 = vadd.f32 %v1419, %v1099
      %v1421 = vadd.f32 %v1420, %v1100
      %v1422 = vadd.f32 %v1421, %v1101
      %v1423 = vadd.f32 %v1422, %v1102
      %1424 = vadd.xlane.f32.xlu0 %v1423
      %v1425 = vpop.xlane.xlu0 %1424
      %v1426 = vadd.f32 %v1103, %v1104
      %v1427 = vadd.f32 %v1426, %v1105
      %v1428 = vadd.f32 %v1427, %v1106
      %v1429 = vadd.f32 %v1428, %v1107
      %v1430 = vadd.f32 %v1429, %v1108
      %v1431 = vadd.f32 %v1430, %v1109
      %v1432 = vadd.f32 %v1431, %v1110
      %1433 = vadd.xlane.f32.xlu0 %v1432
      %v1434 = vpop.xlane.xlu0 %1433
      %v1435 = vadd.f32 %v1111, %v1112
      %v1436 = vadd.f32 %v1435, %v1113
      %v1437 = vadd.f32 %v1436, %v1114
      %v1438 = vadd.f32 %v1437, %v1115
      %v1439 = vadd.f32 %v1438, %v1116
      %v1440 = vadd.f32 %v1439, %v1117
      %v1441 = vadd.f32 %v1440, %v1118
      %1442 = vadd.xlane.f32.xlu0 %v1441
      %v1443 = vpop.xlane.xlu0 %1442
      %v1444 = vadd.f32 %v1119, %v1120
      %v1445 = vadd.f32 %v1444, %v1121
      %v1446 = vadd.f32 %v1445, %v1122
      %v1447 = vadd.f32 %v1446, %v1123
      %v1448 = vadd.f32 %v1447, %v1124
      %v1449 = vadd.f32 %v1448, %v1125
      %v1450 = vadd.f32 %v1449, %v1126
      %1451 = vadd.xlane.f32.xlu0 %v1450
      %v1452 = vpop.xlane.xlu0 %1451
      %v1453 = vadd.f32 %v1127, %v1128
      %v1454 = vadd.f32 %v1453, %v1129
      %v1455 = vadd.f32 %v1454, %v1130
      %v1456 = vadd.f32 %v1455, %v1131
      %v1457 = vadd.f32 %v1456, %v1132
      %v1458 = vadd.f32 %v1457, %v1133
      %v1459 = vadd.f32 %v1458, %v1134
      %1460 = vadd.xlane.f32.xlu0 %v1459
      %v1461 = vpop.xlane.xlu0 %1460
      %v1462 = vadd.f32 %v1135, %v1136
      %v1463 = vadd.f32 %v1462, %v1137
      %v1464 = vadd.f32 %v1463, %v1138
      %v1465 = vadd.f32 %v1464, %v1139
      %v1466 = vadd.f32 %v1465, %v1140
      %v1467 = vadd.f32 %v1466, %v1141
      %v1468 = vadd.f32 %v1467, %v1142
      %1469 = vadd.xlane.f32.xlu0 %v1468
      %v1470 = vpop.xlane.xlu0 %1469
      %v1471 = vadd.f32 %v1143, %v1144
      %v1472 = vadd.f32 %v1471, %v1145
      %v1473 = vadd.f32 %v1472, %v1146
      %v1474 = vadd.f32 %v1473, %v1147
      %v1475 = vadd.f32 %v1474, %v1148
      %v1476 = vadd.f32 %v1475, %v1149
      %v1477 = vadd.f32 %v1476, %v1150
      %1478 = vadd.xlane.f32.xlu0 %v1477
      %v1479 = vpop.xlane.xlu0 %1478
      %v1480 = vadd.f32 %v1151, %v1152
      %v1481 = vadd.f32 %v1480, %v1153
      %v1482 = vadd.f32 %v1481, %v1154
      %v1483 = vadd.f32 %v1482, %v1155
      %v1484 = vadd.f32 %v1483, %v1156
      %v1485 = vadd.f32 %v1484, %v1157
      %v1486 = vadd.f32 %v1485, %v1158
      %1487 = vadd.xlane.f32.xlu0 %v1486
      %v1488 = vpop.xlane.xlu0 %1487
      %v1489 = vadd.f32 %v1159, %v1160
      %v1490 = vadd.f32 %v1489, %v1161
      %v1491 = vadd.f32 %v1490, %v1162
      %v1492 = vadd.f32 %v1491, %v1163
      %v1493 = vadd.f32 %v1492, %v1164
      %v1494 = vadd.f32 %v1493, %v1165
      %v1495 = vadd.f32 %v1494, %v1166
      %1496 = vadd.xlane.f32.xlu0 %v1495
      %v1497 = vpop.xlane.xlu0 %1496
      %v1498 = vadd.f32 %v1167, %v1168
      %v1499 = vadd.f32 %v1498, %v1169
      %v1500 = vadd.f32 %v1499, %v1170
      %v1501 = vadd.f32 %v1500, %v1171
      %v1502 = vadd.f32 %v1501, %v1172
      %v1503 = vadd.f32 %v1502, %v1173
      %v1504 = vadd.f32 %v1503, %v1174
      %1505 = vadd.xlane.f32.xlu0 %v1504
      %v1506 = vpop.xlane.xlu0 %1505
      %v1507 = vadd.f32 %v1175, %v1176
      %v1508 = vadd.f32 %v1507, %v1177
      %v1509 = vadd.f32 %v1508, %v1178
      %v1510 = vadd.f32 %v1509, %v1179
      %v1511 = vadd.f32 %v1510, %v1180
      %v1512 = vadd.f32 %v1511, %v1181
      %v1513 = vadd.f32 %v1512, %v1182
      %1514 = vadd.xlane.f32.xlu0 %v1513
      %v1515 = vpop.xlane.xlu0 %1514
      %v1516 = vadd.f32 %v1183, %v1184
      %v1517 = vadd.f32 %v1516, %v1185
      %v1518 = vadd.f32 %v1517, %v1186
      %v1519 = vadd.f32 %v1518, %v1187
      %v1520 = vadd.f32 %v1519, %v1188
      %v1521 = vadd.f32 %v1520, %v1189
      %v1522 = vadd.f32 %v1521, %v1190
      %1523 = vadd.xlane.f32.xlu0 %v1522
      %v1524 = vpop.xlane.xlu0 %1523
      %v1525 = vadd.f32 %v1191, %v1192
      %v1526 = vadd.f32 %v1525, %v1193
      %v1527 = vadd.f32 %v1526, %v1194
      %v1528 = vadd.f32 %v1527, %v1195
      %v1529 = vadd.f32 %v1528, %v1196
      %v1530 = vadd.f32 %v1529, %v1197
      %v1531 = vadd.f32 %v1530, %v1198
      %1532 = vadd.xlane.f32.xlu0 %v1531
      %v1533 = vpop.xlane.xlu0 %1532
      %v1534 = vadd.f32 %v1199, %v1200
      %v1535 = vadd.f32 %v1534, %v1201
      %v1536 = vadd.f32 %v1535, %v1202
      %v1537 = vadd.f32 %v1536, %v1203
      %v1538 = vadd.f32 %v1537, %v1204
      %v1539 = vadd.f32 %v1538, %v1205
      %v1540 = vadd.f32 %v1539, %v1206
      %1541 = vadd.xlane.f32.xlu0 %v1540
      %v1542 = vpop.xlane.xlu0 %1541
      %v1543 = vadd.f32 %v1207, %v1208
      %v1544 = vadd.f32 %v1543, %v1209
      %v1545 = vadd.f32 %v1544, %v1210
      %v1546 = vadd.f32 %v1545, %v1211
      %v1547 = vadd.f32 %v1546, %v1212
      %v1548 = vadd.f32 %v1547, %v1213
      %v1549 = vadd.f32 %v1548, %v1214
      %1550 = vadd.xlane.f32.xlu0 %v1549
      %v1551 = vpop.xlane.xlu0 %1550
      %v1552 = vadd.f32 %v1215, %v1216
      %v1553 = vadd.f32 %v1552, %v1217
      %v1554 = vadd.f32 %v1553, %v1218
      %v1555 = vadd.f32 %v1554, %v1219
      %v1556 = vadd.f32 %v1555, %v1220
      %v1557 = vadd.f32 %v1556, %v1221
      %v1558 = vadd.f32 %v1557, %v1222
      %1559 = vadd.xlane.f32.xlu0 %v1558
      %v1560 = vpop.xlane.xlu0 %1559
      %v1561 = vadd.f32 %v1223, %v1224
      %v1562 = vadd.f32 %v1561, %v1225
      %v1563 = vadd.f32 %v1562, %v1226
      %v1564 = vadd.f32 %v1563, %v1227
      %v1565 = vadd.f32 %v1564, %v1228
      %v1566 = vadd.f32 %v1565, %v1229
      %v1567 = vadd.f32 %v1566, %v1230
      %1568 = vadd.xlane.f32.xlu0 %v1567
      %v1569 = vpop.xlane.xlu0 %1568
      %v1570 = vadd.f32 %v1231, %v1232
      %v1571 = vadd.f32 %v1570, %v1233
      %v1572 = vadd.f32 %v1571, %v1234
      %v1573 = vadd.f32 %v1572, %v1235
      %v1574 = vadd.f32 %v1573, %v1236
      %v1575 = vadd.f32 %v1574, %v1237
      %v1576 = vadd.f32 %v1575, %v1238
      %1577 = vadd.xlane.f32.xlu0 %v1576
      %v1578 = vpop.xlane.xlu0 %1577
      %v1579 = vadd.f32 %v1239, %v1240
      %v1580 = vadd.f32 %v1579, %v1241
      %v1581 = vadd.f32 %v1580, %v1242
      %v1582 = vadd.f32 %v1581, %v1243
      %v1583 = vadd.f32 %v1582, %v1244
      %v1584 = vadd.f32 %v1583, %v1245
      %v1585 = vadd.f32 %v1584, %v1246
      %1586 = vadd.xlane.f32.xlu0 %v1585
      %v1587 = vpop.xlane.xlu0 %1586
      %v1588 = vadd.f32 %v1247, %v1248
      %v1589 = vadd.f32 %v1588, %v1249
      %v1590 = vadd.f32 %v1589, %v1250
      %v1591 = vadd.f32 %v1590, %v1251
      %v1592 = vadd.f32 %v1591, %v1252
      %v1593 = vadd.f32 %v1592, %v1253
      %v1594 = vadd.f32 %v1593, %v1254
      %1595 = vadd.xlane.f32.xlu0 %v1594
      %v1596 = vpop.xlane.xlu0 %1595
      %v1597 = vadd.f32 %v1255, %v1256
      %v1598 = vadd.f32 %v1597, %v1257
      %v1599 = vadd.f32 %v1598, %v1258
      %v1600 = vadd.f32 %v1599, %v1259
      %v1601 = vadd.f32 %v1600, %v1260
      %v1602 = vadd.f32 %v1601, %v1261
      %v1603 = vadd.f32 %v1602, %v1262
      %1604 = vadd.xlane.f32.xlu0 %v1603
      %v1605 = vpop.xlane.xlu0 %1604
      %v1606 = vadd.f32 %v1263, %v1264
      %v1607 = vadd.f32 %v1606, %v1265
      %v1608 = vadd.f32 %v1607, %v1266
      %v1609 = vadd.f32 %v1608, %v1267
      %v1610 = vadd.f32 %v1609, %v1268
      %v1611 = vadd.f32 %v1610, %v1269
      %v1612 = vadd.f32 %v1611, %v1270
      %1613 = vadd.xlane.f32.xlu0 %v1612
      %v1614 = vpop.xlane.xlu0 %1613
      %v1615 = vadd.f32 %v1271, %v1272
      %v1616 = vadd.f32 %v1615, %v1273
      %v1617 = vadd.f32 %v1616, %v1274
      %v1618 = vadd.f32 %v1617, %v1275
      %v1619 = vadd.f32 %v1618, %v1276
      %v1620 = vadd.f32 %v1619, %v1277
      %v1621 = vadd.f32 %v1620, %v1278
      %1622 = vadd.xlane.f32.xlu0 %v1621
      %v1623 = vpop.xlane.xlu0 %1622
      %v1624 = vadd.f32 %v1279, %v1280
      %v1625 = vadd.f32 %v1624, %v1281
      %v1626 = vadd.f32 %v1625, %v1282
      %v1627 = vadd.f32 %v1626, %v1283
      %v1628 = vadd.f32 %v1627, %v1284
      %v1629 = vadd.f32 %v1628, %v1285
      %v1630 = vadd.f32 %v1629, %v1286
      %1631 = vadd.xlane.f32.xlu0 %v1630
      %v1632 = vpop.xlane.xlu0 %1631
      %v1633 = vadd.f32 %v1287, %v1288
      %v1634 = vadd.f32 %v1633, %v1289
      %v1635 = vadd.f32 %v1634, %v1290
      %v1636 = vadd.f32 %v1635, %v1291
      %v1637 = vadd.f32 %v1636, %v1292
      %v1638 = vadd.f32 %v1637, %v1293
      %v1639 = vadd.f32 %v1638, %v1294
      %1640 = vadd.xlane.f32.xlu0 %v1639
      %v1641 = vpop.xlane.xlu0 %1640
      %v1642 = vadd.f32 %v1295, %v1296
      %v1643 = vadd.f32 %v1642, %v1297
      %v1644 = vadd.f32 %v1643, %v1298
      %v1645 = vadd.f32 %v1644, %v1299
      %v1646 = vadd.f32 %v1645, %v1300
      %v1647 = vadd.f32 %v1646, %v1301
      %v1648 = vadd.f32 %v1647, %v1302
      %1649 = vadd.xlane.f32.xlu0 %v1648
      %v1650 = vpop.xlane.xlu0 %1649
      %v1651 = vadd.f32 %v1303, %v1304
      %v1652 = vadd.f32 %v1651, %v1305
      %v1653 = vadd.f32 %v1652, %v1306
      %v1654 = vadd.f32 %v1653, %v1307
      %v1655 = vadd.f32 %v1654, %v1308
      %v1656 = vadd.f32 %v1655, %v1309
      %v1657 = vadd.f32 %v1656, %v1310
      %1658 = vadd.xlane.f32.xlu0 %v1657
      %v1659 = vpop.xlane.xlu0 %1658
      %v1660 = vadd.f32 %v1311, %v1312
      %v1661 = vadd.f32 %v1660, %v1313
      %v1662 = vadd.f32 %v1661, %v1314
      %v1663 = vadd.f32 %v1662, %v1315
      %v1664 = vadd.f32 %v1663, %v1316
      %v1665 = vadd.f32 %v1664, %v1317
      %v1666 = vadd.f32 %v1665, %v1318
      %1667 = vadd.xlane.f32.xlu0 %v1666
      %v1668 = vpop.xlane.xlu0 %1667
      %v1669 = vadd.f32 %v1319, %v1320
      %v1670 = vadd.f32 %v1669, %v1321
      %v1671 = vadd.f32 %v1670, %v1322
      %v1672 = vadd.f32 %v1671, %v1323
      %v1673 = vadd.f32 %v1672, %v1324
      %v1674 = vadd.f32 %v1673, %v1325
      %v1675 = vadd.f32 %v1674, %v1326
      %1676 = vadd.xlane.f32.xlu0 %v1675
      %v1677 = vpop.xlane.xlu0 %1676
      %v1678 = vadd.f32 %v1327, %v1328
      %v1679 = vadd.f32 %v1678, %v1329
      %v1680 = vadd.f32 %v1679, %v1330
      %v1681 = vadd.f32 %v1680, %v1331
      %v1682 = vadd.f32 %v1681, %v1332
      %v1683 = vadd.f32 %v1682, %v1333
      %v1684 = vadd.f32 %v1683, %v1334
      %1685 = vadd.xlane.f32.xlu0 %v1684
      %v1686 = vpop.xlane.xlu0 %1685
      %v1687 = vadd.f32 %v1335, %v1336
      %v1688 = vadd.f32 %v1687, %v1337
      %v1689 = vadd.f32 %v1688, %v1338
      %v1690 = vadd.f32 %v1689, %v1339
      %v1691 = vadd.f32 %v1690, %v1340
      %v1692 = vadd.f32 %v1691, %v1341
      %v1693 = vadd.f32 %v1692, %v1342
      %1694 = vadd.xlane.f32.xlu0 %v1693
      %v1695 = vpop.xlane.xlu0 %1694
      %v1696 = vadd.f32 %v1343, %v1344
      %v1697 = vadd.f32 %v1696, %v1345
      %v1698 = vadd.f32 %v1697, %v1346
      %v1699 = vadd.f32 %v1698, %v1347
      %v1700 = vadd.f32 %v1699, %v1348
      %v1701 = vadd.f32 %v1700, %v1349
      %v1702 = vadd.f32 %v1701, %v1350
      %1703 = vadd.xlane.f32.xlu0 %v1702
      %v1704 = vpop.xlane.xlu0 %1703
      %v1705 = vadd.f32 %v1351, %v1352
      %v1706 = vadd.f32 %v1705, %v1353
      %v1707 = vadd.f32 %v1706, %v1354
      %v1708 = vadd.f32 %v1707, %v1355
      %v1709 = vadd.f32 %v1708, %v1356
      %v1710 = vadd.f32 %v1709, %v1357
      %v1711 = vadd.f32 %v1710, %v1358
      %1712 = vadd.xlane.f32.xlu0 %v1711
      %v1713 = vpop.xlane.xlu0 %1712
      %v1714 = vadd.f32 %v1359, %v1360
      %v1715 = vadd.f32 %v1714, %v1361
      %v1716 = vadd.f32 %v1715, %v1362
      %v1717 = vadd.f32 %v1716, %v1363
      %v1718 = vadd.f32 %v1717, %v1364
      %v1719 = vadd.f32 %v1718, %v1365
      %v1720 = vadd.f32 %v1719, %v1366
      %1721 = vadd.xlane.f32.xlu0 %v1720
      %v1722 = vpop.xlane.xlu0 %1721
      %v1723 = vadd.f32 %v1367, %v1368
      %v1724 = vadd.f32 %v1723, %v1369
      %v1725 = vadd.f32 %v1724, %v1370
      %v1726 = vadd.f32 %v1725, %v1371
      %v1727 = vadd.f32 %v1726, %v1372
      %v1728 = vadd.f32 %v1727, %v1373
      %v1729 = vadd.f32 %v1728, %v1374
      %1730 = vadd.xlane.f32.xlu0 %v1729
      %v1731 = vpop.xlane.xlu0 %1730
      %v1732 = vadd.f32 %v1375, %v1376
      %v1733 = vadd.f32 %v1732, %v1377
      %v1734 = vadd.f32 %v1733, %v1378
      %v1735 = vadd.f32 %v1734, %v1379
      %v1736 = vadd.f32 %v1735, %v1380
      %v1737 = vadd.f32 %v1736, %v1381
      %v1738 = vadd.f32 %v1737, %v1382
      %1739 = vadd.xlane.f32.xlu0 %v1738
      %v1740 = vpop.xlane.xlu0 %1739
      %v1741 = vadd.f32 %v1383, %v1384
      %v1742 = vadd.f32 %v1741, %v1385
      %v1743 = vadd.f32 %v1742, %v1386
      %v1744 = vadd.f32 %v1743, %v1387
      %v1745 = vadd.f32 %v1744, %v1388
      %v1746 = vadd.f32 %v1745, %v1389
      %v1747 = vadd.f32 %v1746, %v1390
      %1748 = vadd.xlane.f32.xlu0 %v1747
      %v1749 = vpop.xlane.xlu0 %1748
      %v1750 = vadd.f32 %v1391, %v1392
      %v1751 = vadd.f32 %v1750, %v1393
      %v1752 = vadd.f32 %v1751, %v1394
      %v1753 = vadd.f32 %v1752, %v1395
      %v1754 = vadd.f32 %v1753, %v1396
      %v1755 = vadd.f32 %v1754, %v1397
      %v1756 = vadd.f32 %v1755, %v1398
      %1757 = vadd.xlane.f32.xlu0 %v1756
      %v1758 = vpop.xlane.xlu0 %1757
      %v1799 = vlaneseq
      %v1800 = vand.u32 %v1799, 127
      %v1801 = vlaneseq
      %v1802 = vshrl.u32 %v1801, 7
      %v1803 = vsub.s32 %v1800, %v1802
      %v1804 = vrot.slane %v1407, %v1803
      %v1805 = vadd.s32 %v1800, 4294967288
      %v1806 = vlaneseq
      %v1807 = vshrl.u32 %v1806, 7
      %v1808 = vsub.s32 %v1805, %v1807
      %v1809 = vrot.slane %v1416, %v1808
      %vm1810 = vcmask 130112
      %v1811 = vsel %vm1810, %v1809, %v1804
      %v1812 = vadd.s32 %v1800, 4294967280
      %v1813 = vlaneseq
      %v1814 = vshrl.u32 %v1813, 7
      %v1815 = vsub.s32 %v1812, %v1814
      %v1816 = vrot.slane %v1425, %v1815
      %vm1817 = vcmask 195712
      %v1818 = vsel %vm1817, %v1816, %v1811
      %v1819 = vadd.s32 %v1800, 4294967272
      %v1820 = vlaneseq
      %v1821 = vshrl.u32 %v1820, 7
      %v1822 = vsub.s32 %v1819, %v1821
      %v1823 = vrot.slane %v1434, %v1822
      %vm1824 = vcmask 261312
      %v1825 = vsel %vm1824, %v1823, %v1818
      %v1826 = vlaneseq
      %v1827 = vshrl.u32 %v1826, 7
      %v1828 = vsub.s32 %v1800, %v1827
      %v1829 = vrot.slane %v1443, %v1828
      %v1830 = vlaneseq
      %v1831 = vshrl.u32 %v1830, 7
      %v1832 = vsub.s32 %v1805, %v1831
      %v1833 = vrot.slane %v1452, %v1832
      %v1834 = vsel %vm1810, %v1833, %v1829
      %v1835 = vlaneseq
      %v1836 = vshrl.u32 %v1835, 7
      %v1837 = vsub.s32 %v1812, %v1836
      %v1838 = vrot.slane %v1461, %v1837
      %v1839 = vsel %vm1817, %v1838, %v1834
      %v1840 = vlaneseq
      %v1841 = vshrl.u32 %v1840, 7
      %v1842 = vsub.s32 %v1819, %v1841
      %v1843 = vrot.slane %v1470, %v1842
      %v1844 = vsel %vm1824, %v1843, %v1839
      %v1845 = vlaneseq
      %v1846 = vshrl.u32 %v1845, 7
      %v1847 = vsub.s32 %v1800, %v1846
      %v1848 = vrot.slane %v1479, %v1847
      %v1849 = vlaneseq
      %v1850 = vshrl.u32 %v1849, 7
      %v1851 = vsub.s32 %v1805, %v1850
      %v1852 = vrot.slane %v1488, %v1851
      %v1853 = vsel %vm1810, %v1852, %v1848
      %v1854 = vlaneseq
      %v1855 = vshrl.u32 %v1854, 7
      %v1856 = vsub.s32 %v1812, %v1855
      %v1857 = vrot.slane %v1497, %v1856
      %v1858 = vsel %vm1817, %v1857, %v1853
      %v1859 = vlaneseq
      %v1860 = vshrl.u32 %v1859, 7
      %v1861 = vsub.s32 %v1819, %v1860
      %v1862 = vrot.slane %v1506, %v1861
      %v1863 = vsel %vm1824, %v1862, %v1858
      %v1864 = vlaneseq
      %v1865 = vshrl.u32 %v1864, 7
      %v1866 = vsub.s32 %v1800, %v1865
      %v1867 = vrot.slane %v1515, %v1866
      %v1868 = vlaneseq
      %v1869 = vshrl.u32 %v1868, 7
      %v1870 = vsub.s32 %v1805, %v1869
      %v1871 = vrot.slane %v1524, %v1870
      %v1872 = vsel %vm1810, %v1871, %v1867
      %v1873 = vlaneseq
      %v1874 = vshrl.u32 %v1873, 7
      %v1875 = vsub.s32 %v1812, %v1874
      %v1876 = vrot.slane %v1533, %v1875
      %v1877 = vsel %vm1817, %v1876, %v1872
      %v1878 = vlaneseq
      %v1879 = vshrl.u32 %v1878, 7
      %v1880 = vsub.s32 %v1819, %v1879
      %v1881 = vrot.slane %v1542, %v1880
      %v1882 = vsel %vm1824, %v1881, %v1877
      %v1883 = vlaneseq
      %v1884 = vshrl.u32 %v1883, 7
      %v1885 = vsub.s32 %v1800, %v1884
      %v1886 = vrot.slane %v1551, %v1885
      %v1887 = vlaneseq
      %v1888 = vshrl.u32 %v1887, 7
      %v1889 = vsub.s32 %v1805, %v1888
      %v1890 = vrot.slane %v1560, %v1889
      %v1891 = vsel %vm1810, %v1890, %v1886
      %v1892 = vlaneseq
      %v1893 = vshrl.u32 %v1892, 7
      %v1894 = vsub.s32 %v1812, %v1893
      %v1895 = vrot.slane %v1569, %v1894
      %v1896 = vsel %vm1817, %v1895, %v1891
      %v1897 = vlaneseq
      %v1898 = vshrl.u32 %v1897, 7
      %v1899 = vsub.s32 %v1819, %v1898
      %v1900 = vrot.slane %v1578, %v1899
      %v1901 = vsel %vm1824, %v1900, %v1896
      %v1902 = vlaneseq
      %v1903 = vshrl.u32 %v1902, 7
      %v1904 = vsub.s32 %v1800, %v1903
      %v1905 = vrot.slane %v1587, %v1904
      %v1906 = vlaneseq
      %v1907 = vshrl.u32 %v1906, 7
      %v1908 = vsub.s32 %v1805, %v1907
      %v1909 = vrot.slane %v1596, %v1908
      %v1910 = vsel %vm1810, %v1909, %v1905
      %v1911 = vlaneseq
      %v1912 = vshrl.u32 %v1911, 7
      %v1913 = vsub.s32 %v1812, %v1912
      %v1914 = vrot.slane %v1605, %v1913
      %v1915 = vsel %vm1817, %v1914, %v1910
      %v1916 = vlaneseq
      %v1917 = vshrl.u32 %v1916, 7
      %v1918 = vsub.s32 %v1819, %v1917
      %v1919 = vrot.slane %v1614, %v1918
      %v1920 = vsel %vm1824, %v1919, %v1915
      %v1921 = vlaneseq
      %v1922 = vshrl.u32 %v1921, 7
      %v1923 = vsub.s32 %v1800, %v1922
      %v1924 = vrot.slane %v1623, %v1923
      %v1925 = vlaneseq
      %v1926 = vshrl.u32 %v1925, 7
      %v1927 = vsub.s32 %v1805, %v1926
      %v1928 = vrot.slane %v1632, %v1927
      %v1929 = vsel %vm1810, %v1928, %v1924
      %v1930 = vlaneseq
      %v1931 = vshrl.u32 %v1930, 7
      %v1932 = vsub.s32 %v1812, %v1931
      %v1933 = vrot.slane %v1641, %v1932
      %v1934 = vsel %vm1817, %v1933, %v1929
      %v1935 = vlaneseq
      %v1936 = vshrl.u32 %v1935, 7
      %v1937 = vsub.s32 %v1819, %v1936
      %v1938 = vrot.slane %v1650, %v1937
      %v1939 = vsel %vm1824, %v1938, %v1934
      %v1940 = vlaneseq
      %v1941 = vshrl.u32 %v1940, 7
      %v1942 = vsub.s32 %v1800, %v1941
      %v1943 = vrot.slane %v1659, %v1942
      %v1944 = vlaneseq
      %v1945 = vshrl.u32 %v1944, 7
      %v1946 = vsub.s32 %v1805, %v1945
      %v1947 = vrot.slane %v1668, %v1946
      %v1948 = vsel %vm1810, %v1947, %v1943
      %v1949 = vlaneseq
      %v1950 = vshrl.u32 %v1949, 7
      %v1951 = vsub.s32 %v1812, %v1950
      %v1952 = vrot.slane %v1677, %v1951
      %v1953 = vsel %vm1817, %v1952, %v1948
      %v1954 = vlaneseq
      %v1955 = vshrl.u32 %v1954, 7
      %v1956 = vsub.s32 %v1819, %v1955
      %v1957 = vrot.slane %v1686, %v1956
      %v1958 = vsel %vm1824, %v1957, %v1953
      %v1959 = vlaneseq
      %v1960 = vshrl.u32 %v1959, 7
      %v1961 = vsub.s32 %v1800, %v1960
      %v1962 = vrot.slane %v1695, %v1961
      %v1963 = vlaneseq
      %v1964 = vshrl.u32 %v1963, 7
      %v1965 = vsub.s32 %v1805, %v1964
      %v1966 = vrot.slane %v1704, %v1965
      %v1967 = vsel %vm1810, %v1966, %v1962
      %v1968 = vlaneseq
      %v1969 = vshrl.u32 %v1968, 7
      %v1970 = vsub.s32 %v1812, %v1969
      %v1971 = vrot.slane %v1713, %v1970
      %v1972 = vsel %vm1817, %v1971, %v1967
      %v1973 = vlaneseq
      %v1974 = vshrl.u32 %v1973, 7
      %v1975 = vsub.s32 %v1819, %v1974
      %v1976 = vrot.slane %v1722, %v1975
      %v1977 = vsel %vm1824, %v1976, %v1972
      %v1978 = vlaneseq
      %v1979 = vshrl.u32 %v1978, 7
      %v1980 = vsub.s32 %v1800, %v1979
      %v1981 = vrot.slane %v1731, %v1980
      %v1982 = vlaneseq
      %v1983 = vshrl.u32 %v1982, 7
      %v1984 = vsub.s32 %v1805, %v1983
      %v1985 = vrot.slane %v1740, %v1984
      %v1986 = vsel %vm1810, %v1985, %v1981
      %v1987 = vlaneseq
      %v1988 = vshrl.u32 %v1987, 7
      %v1989 = vsub.s32 %v1812, %v1988
      %v1990 = vrot.slane %v1749, %v1989
      %v1991 = vsel %vm1817, %v1990, %v1986
      %v1992 = vlaneseq
      %v1993 = vshrl.u32 %v1992, 7
      %v1994 = vsub.s32 %v1819, %v1993
      %v1995 = vrot.slane %v1758, %v1994
      %v1996 = vsel %vm1824, %v1995, %v1991
      %vm1997 = vcmask 1041409
      %v1998 = vsel %vm1997, %v1844, %v1825
      %vm1999 = vcmask 1042434
      %v2000 = vsel %vm1999, %v1863, %v1998
      %vm2001 = vcmask 1043459
      %v2002 = vsel %vm2001, %v1882, %v2000
      %vm2003 = vcmask 1044484
      %v2004 = vsel %vm2003, %v1901, %v2002
      %vm2005 = vcmask 1045509
      %v2006 = vsel %vm2005, %v1920, %v2004
      %vm2007 = vcmask 1046534
      %v2008 = vsel %vm2007, %v1939, %v2006
      %vm2009 = vcmask 1047559
      %v2010 = vsel %vm2009, %v1958, %v2008
      %v2011 = vsel %vm1997, %v1996, %v1977
      %vm2014 = vcmask 261120
      %v2015 = vsel %vm2014, %v2010, 0.0
      %2016 = vadd.xlane.f32.xlu0 %v2015
      %v2017 = vpop.xlane.xlu0 %2016
      %vm2018 = vcmask 254976
      %v2019 = vsel %vm2018, %v2011, 0.0
      %2020 = vadd.xlane.f32.xlu0 %v2019
      %v2021 = vpop.xlane.xlu0 %2020
      %v2022 = vld [vmem:[%s4] sm:$0xff]
      %v2023 = vld [vmem:[%s4 + $0x8] sm:$0x3]
      %v2024 = vadd.f32 %v2017, %v2022
      %v2025 = vadd.f32 %v2021, %v2023
      %vm2026 = vcmask 7168
      %2027 = vst.msk [vmem:[%s224] sm:$0xff] %vm2026, %v2024
      %vm2028 = vcmask 1024
      %2029 = vst.msk [vmem:[%s224 + $0x8] sm:$0x3] %vm2028, %v2025
      %p2030 = scmp.lt.s32.totalorder %s16, 1
      %s2031 = scalar_select %p2030, %s16, 1
      %s2032 = smul.addr %s2031, 2
      %s2033 = smul.addr %s2032, 8
      %s2034 = scalar_lea.vmem %s5, %s2033
      // Predicated region
      $region41: #{example_model_forward.1} parent=39 // pred_check
        %p2035 = pneg %p144
      $region42: #{example_model_forward.1} parent=39 // pred_check_branch
        %2037 = sbr.rel (%p2035) target = $region44
      $region43: #{example_model_forward.1} parent=39 // pred_region
        _
      $region44: #{example_model_forward.1} parent=39 // pred_fallthru
        _
    $region40: #{example_model_forward.1} parent=5 // pred_fallthru
      _
    %p2038 = scmp.le.s32.totalorder 2, %s11
    // Predicated region
    $region45: #{example_model_forward.1} parent=5 // pred_check
      %p2039 = pneg %p2038
    $region46: #{example_model_forward.1} parent=5 // pred_check_branch
      %2041 = sbr.rel (%p2039) target = $region48
    $region47: #{example_model_forward.1} parent=5 // pred_region
      %s2042 = ssub.s32 %s11, 2
      // Predicated region
      $region49: #{example_model_forward.1} parent=47 // pred_check
        %p2043 = pneg %p150
      $region50: #{example_model_forward.1} parent=47 // pred_check_branch
        %2045 = sbr.rel (%p2043) target = $region52
      $region51: #{example_model_forward.1} parent=47 // pred_region
        %p2046 = scmp.lt.s32.totalorder %s17, 1
        %s2047 = scalar_select %p2046, %s17, 1
        %s2048 = smul.addr %s2047, 2
        %s2049 = smul.addr %s2048, 8
        %s2050 = scalar_lea.vmem %s5, %s2049
      $region52: #{example_model_forward.1} parent=47 // pred_fallthru
        _
    $region48: #{example_model_forward.1} parent=5 // pred_fallthru
      _
  $region6: #{example_model_forward.1} parent=0 // loop_footer
    %s15 = sadd.s32 1, %s11
  $region7: #{example_model_forward.1} parent=0 // loop_footer_branch
    %10 = sbr.rel target = $region3
  $region8: #{example_model_forward.1} parent=0 // loop_exit
    _

</llo_original>
